<compile_context>
chip_gen: v6e
topology: v6e:2x2x1
jax: 0.10.0
libtpu: 0.0.40
codegen_flags: <defaults>
</compile_context>

<pallas_src>
import functools

import jax
import jax.numpy as jnp
from jax import lax
from jax.experimental import pallas as pl
from jax.experimental.pallas import tpu as pltpu

_VMEM_FALLBACK = 32 * 1024 * 1024


@functools.lru_cache(maxsize=None)
def _vmem_limit_bytes():
    """Generation-aware scoped-VMEM budget (3/4 of physical, capped at 96 MiB)."""
    try:
        cap = getattr(pltpu.get_tpu_info(), "vmem_capacity_bytes", None)
        if cap:
            return int(min(cap * 3 // 4, 96 * 1024 * 1024))
    except Exception:
        pass
    return _VMEM_FALLBACK


def _pick_tile(dim, target, align):
    """Largest tile <= target that divides `dim` (power-of-2 steps, >= align),
    falling back to the full dimension (always a legal BlockSpec block)."""
    if dim <= target:
        return dim
    t = target
    while t >= align and dim % t:
        t //= 2
    return t if (t >= align and dim % t == 0) else dim


def _attn_tiles(L, S, H, d, vmem_bytes):
    """Pick q / kv tile targets so bf16 blocks + f32 score intermediates fit."""
    tq, tkv = 512, 512

    def footprint(tq_, tkv_):
        score = 2 * H * tq_ * tkv_ * 4                 # s and p, f32
        blocks = 2 * 2 * H * (tq_ + 2 * tkv_) * d      # double-buffered bf16 q/k/v
        out_blk = 2 * 2 * tq_ * H * d                  # double-buffered bf16 out
        scratch = H * tq_ * (d + 2) * 4                # m / l / acc f32
        return score + blocks + out_blk + scratch

    budget = vmem_bytes // 2
    while tkv > 128 and footprint(tq, tkv) > budget:
        tkv //= 2
    while tq > 128 and footprint(tq, tkv) > budget:
        tq //= 2
    return _pick_tile(L, tq, 16), _pick_tile(S, tkv, 128)


# ---------------------------------------------------------------------------
# Tiled linear:  o = x @ w^T + b     x: (M, K) bf16, w: (N, K) bf16, b: (1, N) f32
# ---------------------------------------------------------------------------
def linear_kernel(x_ref, w_ref, b_ref, o_ref, acc_ref):
    k = pl.program_id(2)

    @pl.when(k == 0)
    def _():
        acc_ref[...] = jnp.zeros_like(acc_ref)

    # Contract x's last axis against w's last axis (PyTorch weight layout, no transpose).
    acc_ref[...] += lax.dot_general(
        x_ref[...], w_ref[...], (((1,), (1,)), ((), ())),
        preferred_element_type=jnp.float32)

    @pl.when(k == pl.num_programs(2) - 1)
    def _():
        o_ref[...] = (acc_ref[...] + b_ref[...]).astype(o_ref.dtype)


def pallas_linear(x, w, b, *, out_dtype=None, tm=512, tn=512, tk=512):
    """x: (M, K), w: (N, K) PyTorch-style weight, b: (N,). Returns (M, N)."""
    M, K = x.shape
    Nout = w.shape[0]
    out_dtype = out_dtype if out_dtype is not None else x.dtype
    vmem = _vmem_limit_bytes()

    tm = _pick_tile(M, tm, 16)       # sublane-side tiles: bf16-packed (16) or full dim
    tn = _pick_tile(Nout, tn, 128)   # lane-side tiles: multiple of 128 or full dim
    tk = _pick_tile(K, tk, 128)

    x = x.astype(jnp.bfloat16)
    w = w.astype(jnp.bfloat16)
    b2 = b.astype(jnp.float32).reshape(1, Nout)

    grid = (M // tm, Nout // tn, K // tk)
    cost = pl.CostEstimate(
        flops=2 * M * Nout * K,
        transcendentals=0,
        bytes_accessed=(M * K + Nout * K) * 2 + Nout * 4
        + M * Nout * jnp.dtype(out_dtype).itemsize)

    return pl.pallas_call(
        linear_kernel,
        out_shape=jax.ShapeDtypeStruct((M, Nout), out_dtype),
        grid_spec=pltpu.PrefetchScalarGridSpec(
            num_scalar_prefetch=0,
            grid=grid,
            in_specs=[
                pl.BlockSpec((tm, tk), lambda i, j, k: (i, k)),
                pl.BlockSpec((tn, tk), lambda i, j, k: (j, k)),
                pl.BlockSpec((1, tn), lambda i, j, k: (0, j)),
            ],
            out_specs=pl.BlockSpec((tm, tn), lambda i, j, k: (i, j)),
            scratch_shapes=[pltpu.VMEM((tm, tn), jnp.float32)]),
        compiler_params=pltpu.CompilerParams(
            dimension_semantics=("parallel", "parallel", "arbitrary"),
            vmem_limit_bytes=vmem),
        cost_estimate=cost,
    )(x, w, b2)


# ---------------------------------------------------------------------------
# Flash-style attention: one batch element, all H heads per grid step,
# K/V tiled along the source axis with online softmax.
#   q: (N, H, L, d), k/v: (N, H, S, d)  ->  o: (N, L, E)   (heads merged, lane-dense)
# ---------------------------------------------------------------------------
def attn_kernel(q_ref, k_ref, v_ref, o_ref, m_sc, l_sc, acc_sc, *,
                num_heads, head_dim, approx_recip):
    kv = pl.program_id(2)

    @pl.when(kv == 0)
    def _():
        m_sc[...] = jnp.full(m_sc.shape, -jnp.inf, m_sc.dtype)
        l_sc[...] = jnp.zeros(l_sc.shape, l_sc.dtype)
        acc_sc[...] = jnp.zeros(acc_sc.shape, acc_sc.dtype)

    q = q_ref[0]                  # (H, tq, d) bf16; 1/sqrt(d) folded into Wq/bq already
    k = k_ref[0]                  # (H, tk, d)
    v = v_ref[0]                  # (H, tk, d)

    # batched QK^T over the head axis, f32 accumulation
    s = jnp.einsum("hqd,hkd->hqk", q, k,
                   preferred_element_type=jnp.float32)     # (H, tq, tk)

    m_prev = m_sc[...]
    m_new = jnp.maximum(m_prev, jnp.max(s, axis=-1, keepdims=True))
    alpha = jnp.exp(m_prev - m_new)
    p = jnp.exp(s - m_new)                                  # f32 softmax math

    l_sc[...] = alpha * l_sc[...] + jnp.sum(p, axis=-1, keepdims=True)
    acc_sc[...] = alpha * acc_sc[...] + jnp.einsum(
        "hqk,hkd->hqd", p.astype(v.dtype), v,
        preferred_element_type=jnp.float32)
    m_sc[...] = m_new

    @pl.when(kv == pl.num_programs(2) - 1)
    def _():
        if approx_recip:
            inv_l = pl.reciprocal(l_sc[...], approx=True)   # EUP, ~free slot
        else:
            inv_l = 1.0 / l_sc[...]
        # Merge heads into the lane-dense (tq, E) output block.  Static per-head
        # lane-slice stores run once per q tile (finalize only, not the kv loop);
        # the HBM writeback of the whole (1, tq, E) block is a dense store.
        for h in range(num_heads):
            lo = h * head_dim
            o_ref[0, :, lo:lo + head_dim] = (acc_sc[h] * inv_l[h]).astype(o_ref.dtype)


def pallas_attention(qh, kh, vh, *, approx_recip=True):
    """qh: (N, H, L, d), kh/vh: (N, H, S, d), bf16. Returns (N, L, H*d) bf16."""
    N, H, L, d = qh.shape
    S = kh.shape[2]
    E = H * d
    vmem = _vmem_limit_bytes()
    tq, tkv = _attn_tiles(L, S, H, d, vmem)
    grid = (N, L // tq, S // tkv)

    kernel = functools.partial(attn_kernel, num_heads=H, head_dim=d,
                               approx_recip=approx_recip)
    cost = pl.CostEstimate(
        flops=4 * N * H * L * S * d,
        transcendentals=N * H * L * S,
        bytes_accessed=2 * (qh.size + kh.size + vh.size) + 2 * N * L * E)

    return pl.pallas_call(
        kernel,
        out_shape=jax.ShapeDtypeStruct((N, L, E), jnp.bfloat16),
        grid_spec=pltpu.PrefetchScalarGridSpec(
            num_scalar_prefetch=0,
            grid=grid,
            in_specs=[
                pl.BlockSpec((1, H, tq, d), lambda n, qi, ki: (n, 0, qi, 0)),
                pl.BlockSpec((1, H, tkv, d), lambda n, qi, ki: (n, 0, ki, 0)),
                pl.BlockSpec((1, H, tkv, d), lambda n, qi, ki: (n, 0, ki, 0)),
            ],
            out_specs=pl.BlockSpec((1, tq, E), lambda n, qi, ki: (n, qi, 0)),
            scratch_shapes=[
                pltpu.VMEM((H, tq, 1), jnp.float32),   # running max m
                pltpu.VMEM((H, tq, 1), jnp.float32),   # running denom l
                pltpu.VMEM((H, tq, d), jnp.float32),   # output accumulator
            ]),
        compiler_params=pltpu.CompilerParams(
            dimension_semantics=("parallel", "parallel", "arbitrary"),
            vmem_limit_bytes=vmem),
        cost_estimate=cost,
    )(qh, kh, vh)


# ---------------------------------------------------------------------------
# CrossAttention forward == nn.MultiheadAttention(embed_dim, num_heads) forward
# (unmasked, no-dropout path, batch_first=False)
# ---------------------------------------------------------------------------
def cross_attention(query, key, value, in_proj_w, in_proj_b, out_proj_w, out_proj_b,
                    *, num_heads, approx_recip=True):
    L, N, E = query.shape
    S = key.shape[0]
    H = num_heads
    assert E % H == 0
    d = E // H

    # PyTorch packs [Wq; Wk; Wv] row-wise in in_proj_weight.
    # Fold 1/sqrt(d) into Wq/bq once in f32 so the attention kernel never rescales q.
    scale = 1.0 / float(d) ** 0.5
    wq = in_proj_w[:E] * scale
    bq = in_proj_b[:E] * scale
    wk, bk = in_proj_w[E:2 * E], in_proj_b[E:2 * E]
    wv, bv = in_proj_w[2 * E:], in_proj_b[2 * E:]

    # --- in-projections (tiled Pallas matmuls, bf16 outputs feed the MXU) ---
    q_p = pallas_linear(query.reshape(L * N, E), wq, bq, out_dtype=jnp.bfloat16)
    k_p = pallas_linear(key.reshape(S * N, E), wk, bk, out_dtype=jnp.bfloat16)
    v_p = pallas_linear(value.reshape(S * N, E), wv, bv, out_dtype=jnp.bfloat16)

    # --- split heads (XLA glue): (T*N, E) -> (N, H, T, d) ---
    # TODO(synk): fold this head-split into the projection out_specs / attention
    # index_map (clean when d % 128 == 0) to drop these HBM passes entirely.
    def to_heads(x, T):
        return x.reshape(T, N, H, d).transpose(1, 2, 0, 3)

    # --- flash-style attention; output is lane-dense (N, L, E), heads pre-merged ---
    o_nle = pallas_attention(to_heads(q_p, L), to_heads(k_p, S), to_heads(v_p, S),
                             approx_recip=approx_recip)

    # single bf16 transpose back to token-major (L, N, E) order, then out-projection
    o = jnp.transpose(o_nle, (1, 0, 2)).reshape(L * N, E)
    out = pallas_linear(o, out_proj_w, out_proj_b, out_dtype=query.dtype)
    return out.reshape(L, N, E)


# ---------------------------------------------------------------------------
# Demo / smoke test
# ---------------------------------------------------------------------------
if __name__ == "__main__":
    L, S, N, E, H = 8, 8, 2, 32, 4   # seq_q, seq_kv, batch, embed_dim, num_heads

    root = jax.random.PRNGKey(0)
    k_q, k_k, k_v, k_iw, k_ib, k_ow, k_ob = jax.random.split(root, 7)

    query = jax.random.normal(k_q, (L, N, E), jnp.float32)
    key = jax.random.normal(k_k, (S, N, E), jnp.float32)
    value = jax.random.normal(k_v, (S, N, E), jnp.float32)

    # Same parameter shapes as nn.MultiheadAttention(E, H):
    scale_w = 1.0 / (E ** 0.5)
    in_proj_w = jax.random.normal(k_iw, (3 * E, E), jnp.float32) * scale_w
    in_proj_b = jax.random.normal(k_ib, (3 * E,), jnp.float32) * 0.02
    out_proj_w = jax.random.normal(k_ow, (E, E), jnp.float32) * scale_w
    out_proj_b = jax.random.normal(k_ob, (E,), jnp.float32) * 0.02

    fwd = jax.jit(functools.partial(cross_attention, num_heads=H))
    out = fwd(query, key, value, in_proj_w, in_proj_b, out_proj_w, out_proj_b)
    out = jax.block_until_ready(out)

    assert out.shape == (L, N, E), out.shape
    assert bool(jnp.all(jnp.isfinite(out)))
    print("KERNEL_OK")
</pallas_src>

<mosaic_0001>
module attributes {stable_mosaic.version = 11 : i64} {
  func.func @linear_kernel(%arg0: i32, %arg1: i32, %arg2: i32, %arg3: memref<16x32xbf16, #tpu.memory_space<vmem>>, %arg4: memref<32x32xbf16, #tpu.memory_space<vmem>>, %arg5: memref<1x32xf32, #tpu.memory_space<vmem>>, %arg6: memref<16x32xbf16, #tpu.memory_space<vmem>>, %arg7: memref<16x32xf32, #tpu.memory_space<vmem>>) attributes {dimension_semantics = [#tpu.dimension_semantics<parallel>, #tpu.dimension_semantics<parallel>, #tpu.dimension_semantics<arbitrary>], iteration_bounds = array<i64: 1, 1, 1>, scalar_prefetch = 0 : i64, scratch_operands = 1 : i64, tpu.core_type = #tpu.core_type<tc>, window_params = [{transform_indices = @transform_0, window_bounds = array<i64: 16, 32>}, {transform_indices = @transform_1, window_bounds = array<i64: 32, 32>}, {transform_indices = @transform_2, window_bounds = array<i64: 1, 32>}, {transform_indices = @transform_3, window_bounds = array<i64: 16, 32>}]} {
    %c0_i32 = arith.constant 0 : i32
    %0 = arith.cmpi eq, %arg2, %c0_i32 : i32
    %1 = arith.extui %0 : i1 to i32
    %c0_i32_0 = arith.constant 0 : i32
    %2 = arith.cmpi ne, %1, %c0_i32_0 : i32
    scf.if %2 {
      %cst_10 = arith.constant 0.000000e+00 : f32
      %12 = vector.broadcast %cst_10 : f32 to vector<16x32xf32>
      %c0_11 = arith.constant 0 : index
      %c0_12 = arith.constant 0 : index
      %13 = vector.load %arg7[%c0_11, %c0_12] : memref<16x32xf32, #tpu.memory_space<vmem>>, vector<16x32xf32>
      tpu.vector_store %arg7[%c0_11, %c0_12], %12 {strides = array<i32>} : memref<16x32xf32, #tpu.memory_space<vmem>>, vector<16x32xf32>,
    } else {
    }
    %c0 = arith.constant 0 : index
    %c0_1 = arith.constant 0 : index
    %3 = vector.load %arg7[%c0, %c0_1] : memref<16x32xf32, #tpu.memory_space<vmem>>, vector<16x32xf32>
    %c0_2 = arith.constant 0 : index
    %c0_3 = arith.constant 0 : index
    %4 = vector.load %arg3[%c0_2, %c0_3] : memref<16x32xbf16, #tpu.memory_space<vmem>>, vector<16x32xbf16>
    %c0_4 = arith.constant 0 : index
    %c0_5 = arith.constant 0 : index
    %5 = vector.load %arg4[%c0_4, %c0_5] : memref<32x32xbf16, #tpu.memory_space<vmem>>, vector<32x32xbf16>
    %cst = arith.constant dense<0.000000e+00> : vector<16x32xf32>
    %6 = tpu.matmul %4, %5, %cst {dimension_numbers = #tpu.dot_dimension_numbers<[1], [1], [0], [0], [0, 0, 1, 0], [], []>} : vector<16x32xbf16>, vector<32x32xbf16>, vector<16x32xf32> -> vector<16x32xf32>
    %7 = arith.addf %3, %6 : vector<16x32xf32>
    %c0_6 = arith.constant 0 : index
    %c0_7 = arith.constant 0 : index
    %8 = vector.load %arg7[%c0_6, %c0_7] : memref<16x32xf32, #tpu.memory_space<vmem>>, vector<16x32xf32>
    tpu.vector_store %arg7[%c0_6, %c0_7], %7 {strides = array<i32>} : memref<16x32xf32, #tpu.memory_space<vmem>>, vector<16x32xf32>,
    %c0_i32_8 = arith.constant 0 : i32
    %9 = arith.cmpi eq, %arg2, %c0_i32_8 : i32
    %10 = arith.extui %9 : i1 to i32
    %c0_i32_9 = arith.constant 0 : i32
    %11 = arith.cmpi ne, %10, %c0_i32_9 : i32
    scf.if %11 {
      %c0_10 = arith.constant 0 : index
      %c0_11 = arith.constant 0 : index
      %12 = vector.load %arg7[%c0_10, %c0_11] : memref<16x32xf32, #tpu.memory_space<vmem>>, vector<16x32xf32>
      %c0_12 = arith.constant 0 : index
      %c0_13 = arith.constant 0 : index
      %13 = vector.load %arg5[%c0_12, %c0_13] : memref<1x32xf32, #tpu.memory_space<vmem>>, vector<1x32xf32>
      %14 = vector.broadcast %13 : vector<1x32xf32> to vector<16x32xf32>
      %15 = arith.addf %12, %14 : vector<16x32xf32>
      %16 = arith.truncf %15 : vector<16x32xf32> to vector<16x32xbf16>
      %c0_14 = arith.constant 0 : index
      %c0_15 = arith.constant 0 : index
      %17 = vector.load %arg6[%c0_14, %c0_15] : memref<16x32xbf16, #tpu.memory_space<vmem>>, vector<16x32xbf16>
      tpu.vector_store %arg6[%c0_14, %c0_15], %16 {strides = array<i32>} : memref<16x32xbf16, #tpu.memory_space<vmem>>, vector<16x32xbf16>,
    } else {
    }
    return
  }
  func.func @transform_0(%arg0: i32, %arg1: i32, %arg2: i32) -> (i32, i32) {
    %c0_i32 = arith.constant 0 : i32
    return %arg0, %arg2 : i32, i32
  }
  func.func @transform_1(%arg0: i32, %arg1: i32, %arg2: i32) -> (i32, i32) {
    %c0_i32 = arith.constant 0 : i32
    return %arg1, %arg2 : i32, i32
  }
  func.func @transform_2(%arg0: i32, %arg1: i32, %arg2: i32) -> (i32, i32) {
    %c0_i32 = arith.constant 0 : i32
    %c0_i32_0 = arith.constant 0 : i32
    return %c0_i32, %arg1 : i32, i32
  }
  func.func @transform_3(%arg0: i32, %arg1: i32, %arg2: i32) -> (i32, i32) {
    %c0_i32 = arith.constant 0 : i32
    return %arg0, %arg1 : i32, i32
  }
}

module attributes {stable_mosaic.version = 11 : i64} {
  func.func @attn_kernel(%arg0: i32, %arg1: i32, %arg2: i32, %arg3: memref<1x4x8x8xbf16, #tpu.memory_space<vmem>>, %arg4: memref<1x4x8x8xbf16, #tpu.memory_space<vmem>>, %arg5: memref<1x4x8x8xbf16, #tpu.memory_space<vmem>>, %arg6: memref<1x8x32xbf16, #tpu.memory_space<vmem>>, %arg7: memref<4x8x1xf32, #tpu.memory_space<vmem>>, %arg8: memref<4x8x1xf32, #tpu.memory_space<vmem>>, %arg9: memref<4x8x8xf32, #tpu.memory_space<vmem>>) attributes {dimension_semantics = [#tpu.dimension_semantics<parallel>, #tpu.dimension_semantics<parallel>, #tpu.dimension_semantics<arbitrary>], iteration_bounds = array<i64: 2, 1, 1>, scalar_prefetch = 0 : i64, scratch_operands = 3 : i64, tpu.core_type = #tpu.core_type<tc>, window_params = [{transform_indices = @transform_0, window_bounds = array<i64: 1, 4, 8, 8>}, {transform_indices = @transform_1, window_bounds = array<i64: 1, 4, 8, 8>}, {transform_indices = @transform_2, window_bounds = array<i64: 1, 4, 8, 8>}, {transform_indices = @transform_3, window_bounds = array<i64: 1, 8, 32>}]} {
    %c0_i32 = arith.constant 0 : i32
    %0 = arith.cmpi eq, %arg2, %c0_i32 : i32
    %1 = arith.extui %0 : i1 to i32
    %c0_i32_0 = arith.constant 0 : i32
    %2 = arith.cmpi ne, %1, %c0_i32_0 : i32
    scf.if %2 {
      %cst_35 = arith.constant 0xFF800000 : f32
      %36 = vector.broadcast %cst_35 : f32 to vector<4x8x1xf32>
      %c0_36 = arith.constant 0 : index
      %c0_37 = arith.constant 0 : index
      %c0_38 = arith.constant 0 : index
      %37 = vector.load %arg7[%c0_36, %c0_37, %c0_38] : memref<4x8x1xf32, #tpu.memory_space<vmem>>, vector<4x8x1xf32>
      tpu.vector_store %arg7[%c0_36, %c0_37, %c0_38], %36 {strides = array<i32>} : memref<4x8x1xf32, #tpu.memory_space<vmem>>, vector<4x8x1xf32>,
      %cst_39 = arith.constant 0.000000e+00 : f32
      %38 = vector.broadcast %cst_39 : f32 to vector<4x8x1xf32>
      %c0_40 = arith.constant 0 : index
      %c0_41 = arith.constant 0 : index
      %c0_42 = arith.constant 0 : index
      %39 = vector.load %arg8[%c0_40, %c0_41, %c0_42] : memref<4x8x1xf32, #tpu.memory_space<vmem>>, vector<4x8x1xf32>
      tpu.vector_store %arg8[%c0_40, %c0_41, %c0_42], %38 {strides = array<i32>} : memref<4x8x1xf32, #tpu.memory_space<vmem>>, vector<4x8x1xf32>,
      %cst_43 = arith.constant 0.000000e+00 : f32
      %40 = vector.broadcast %cst_43 : f32 to vector<4x8x8xf32>
      %c0_44 = arith.constant 0 : index
      %c0_45 = arith.constant 0 : index
      %c0_46 = arith.constant 0 : index
      %41 = vector.load %arg9[%c0_44, %c0_45, %c0_46] : memref<4x8x8xf32, #tpu.memory_space<vmem>>, vector<4x8x8xf32>
      tpu.vector_store %arg9[%c0_44, %c0_45, %c0_46], %40 {strides = array<i32>} : memref<4x8x8xf32, #tpu.memory_space<vmem>>, vector<4x8x8xf32>,
    } else {
    }
    %c0 = arith.constant 0 : index
    %c0_1 = arith.constant 0 : index
    %c0_2 = arith.constant 0 : index
    %c0_3 = arith.constant 0 : index
    %3 = vector.load %arg3[%c0, %c0_1, %c0_2, %c0_3] : memref<1x4x8x8xbf16, #tpu.memory_space<vmem>>, vector<1x4x8x8xbf16>
    %4 = vector.shape_cast %3 : vector<1x4x8x8xbf16> to vector<4x8x8xbf16>
    %c0_4 = arith.constant 0 : index
    %c0_5 = arith.constant 0 : index
    %c0_6 = arith.constant 0 : index
    %c0_7 = arith.constant 0 : index
    %5 = vector.load %arg4[%c0_4, %c0_5, %c0_6, %c0_7] : memref<1x4x8x8xbf16, #tpu.memory_space<vmem>>, vector<1x4x8x8xbf16>
    %6 = vector.shape_cast %5 : vector<1x4x8x8xbf16> to vector<4x8x8xbf16>
    %c0_8 = arith.constant 0 : index
    %c0_9 = arith.constant 0 : index
    %c0_10 = arith.constant 0 : index
    %c0_11 = arith.constant 0 : index
    %7 = vector.load %arg5[%c0_8, %c0_9, %c0_10, %c0_11] : memref<1x4x8x8xbf16, #tpu.memory_space<vmem>>, vector<1x4x8x8xbf16>
    %8 = vector.shape_cast %7 : vector<1x4x8x8xbf16> to vector<4x8x8xbf16>
    "tpu.trace_start"() <{level = 10 : i32, message = "hqd,hkd->hqk"}> : () -> ()
    %cst = arith.constant dense<0.000000e+00> : vector<4x8x8xf32>
    %9 = tpu.matmul %4, %6, %cst {dimension_numbers = #tpu.dot_dimension_numbers<[2], [2], [1], [1], [0, 0, 0, 1, 1, 1], [0], [0]>} : vector<4x8x8xbf16>, vector<4x8x8xbf16>, vector<4x8x8xf32> -> vector<4x8x8xf32>
    "tpu.trace_stop"() : () -> ()
    %c0_12 = arith.constant 0 : index
    %c0_13 = arith.constant 0 : index
    %c0_14 = arith.constant 0 : index
    %10 = vector.load %arg7[%c0_12, %c0_13, %c0_14] : memref<4x8x1xf32, #tpu.memory_space<vmem>>, vector<4x8x1xf32>
    %cst_15 = arith.constant dense<0xFF800000> : vector<4x8xf32>
    %11 = vector.multi_reduction <maximumf>, %9, %cst_15 [2] : vector<4x8x8xf32> to vector<4x8xf32>
    %12 = vector.shape_cast %11 : vector<4x8xf32> to vector<4x8x1xf32>
    %13 = arith.maximumf %10, %12 : vector<4x8x1xf32>
    %14 = arith.subf %10, %13 : vector<4x8x1xf32>
    %15 = math.exp %14 : vector<4x8x1xf32>
    %16 = vector.broadcast %13 : vector<4x8x1xf32> to vector<4x8x8xf32>
    %17 = arith.subf %9, %16 : vector<4x8x8xf32>
    %18 = math.exp %17 : vector<4x8x8xf32>
    %c0_16 = arith.constant 0 : index
    %c0_17 = arith.constant 0 : index
    %c0_18 = arith.constant 0 : index
    %19 = vector.load %arg8[%c0_16, %c0_17, %c0_18] : memref<4x8x1xf32, #tpu.memory_space<vmem>>, vector<4x8x1xf32>
    %20 = arith.mulf %15, %19 : vector<4x8x1xf32>
    %cst_19 = arith.constant dense<0.000000e+00> : vector<4x8xf32>
    %21 = vector.multi_reduction <add>, %18, %cst_19 [2] : vector<4x8x8xf32> to vector<4x8xf32>
    %22 = vector.shape_cast %21 : vector<4x8xf32> to vector<4x8x1xf32>
    %23 = arith.addf %20, %22 : vector<4x8x1xf32>
    %c0_20 = arith.constant 0 : index
    %c0_21 = arith.constant 0 : index
    %c0_22 = arith.constant 0 : index
    %24 = vector.load %arg8[%c0_20, %c0_21, %c0_22] : memref<4x8x1xf32, #tpu.memory_space<vmem>>, vector<4x8x1xf32>
    tpu.vector_store %arg8[%c0_20, %c0_21, %c0_22], %23 {strides = array<i32>} : memref<4x8x1xf32, #tpu.memory_space<vmem>>, vector<4x8x1xf32>,
    %c0_23 = arith.constant 0 : index
    %c0_24 = arith.constant 0 : index
    %c0_25 = arith.constant 0 : index
    %25 = vector.load %arg9[%c0_23, %c0_24, %c0_25] : memref<4x8x8xf32, #tpu.memory_space<vmem>>, vector<4x8x8xf32>
    %26 = vector.broadcast %15 : vector<4x8x1xf32> to vector<4x8x8xf32>
    %27 = arith.mulf %26, %25 : vector<4x8x8xf32>
    %28 = arith.truncf %18 : vector<4x8x8xf32> to vector<4x8x8xbf16>
    "tpu.trace_start"() <{level = 10 : i32, message = "hqk,hkd->hqd"}> : () -> ()
    %cst_26 = arith.constant dense<0.000000e+00> : vector<4x8x8xf32>
    %29 = tpu.matmul %28, %8, %cst_26 {dimension_numbers = #tpu.dot_dimension_numbers<[2], [1], [1], [2], [0, 0, 0, 1, 1, 2], [0], [0]>} : vector<4x8x8xbf16>, vector<4x8x8xbf16>, vector<4x8x8xf32> -> vector<4x8x8xf32>
    "tpu.trace_stop"() : () -> ()
    %30 = arith.addf %27, %29 : vector<4x8x8xf32>
    %c0_27 = arith.constant 0 : index
    %c0_28 = arith.constant 0 : index
    %c0_29 = arith.constant 0 : index
    %31 = vector.load %arg9[%c0_27, %c0_28, %c0_29] : memref<4x8x8xf32, #tpu.memory_space<vmem>>, vector<4x8x8xf32>
    tpu.vector_store %arg9[%c0_27, %c0_28, %c0_29], %30 {strides = array<i32>} : memref<4x8x8xf32, #tpu.memory_space<vmem>>, vector<4x8x8xf32>,
    %c0_30 = arith.constant 0 : index
    %c0_31 = arith.constant 0 : index
    %c0_32 = arith.constant 0 : index
    %32 = vector.load %arg7[%c0_30, %c0_31, %c0_32] : memref<4x8x1xf32, #tpu.memory_space<vmem>>, vector<4x8x1xf32>
    tpu.vector_store %arg7[%c0_30, %c0_31, %c0_32], %13 {strides = array<i32>} : memref<4x8x1xf32, #tpu.memory_space<vmem>>, vector<4x8x1xf32>,
    %c0_i32_33 = arith.constant 0 : i32
    %33 = arith.cmpi eq, %arg2, %c0_i32_33 : i32
    %34 = arith.extui %33 : i1 to i32
    %c0_i32_34 = arith.constant 0 : i32
    %35 = arith.cmpi ne, %34, %c0_i32_34 : i32
    scf.if %35 {
      %c0_35 = arith.constant 0 : index
      %c0_36 = arith.constant 0 : index
      %c0_37 = arith.constant 0 : index
      %36 = vector.load %arg8[%c0_35, %c0_36, %c0_37] : memref<4x8x1xf32, #tpu.memory_space<vmem>>, vector<4x8x1xf32>
      %37 = tpu.reciprocal %36 {approx = true} : vector<4x8x1xf32> -> vector<4x8x1xf32>
      %c0_38 = arith.constant 0 : index
      %c0_39 = arith.constant 0 : index
      %c0_40 = arith.constant 0 : index
      %38 = vector.load %arg9[%c0_38, %c0_39, %c0_40] : memref<4x8x8xf32, #tpu.memory_space<vmem>>, vector<1x8x8xf32>
      %39 = vector.shape_cast %38 : vector<1x8x8xf32> to vector<8x8xf32>
      %40 = vector.extract_strided_slice %37 {offsets = [0, 0, 0], sizes = [1, 8, 1], strides = [1, 1, 1]} : vector<4x8x1xf32> to vector<1x8x1xf32>
      %41 = vector.shape_cast %40 : vector<1x8x1xf32> to vector<8x1xf32>
      %42 = vector.broadcast %41 : vector<8x1xf32> to vector<8x8xf32>
      %43 = arith.mulf %39, %42 : vector<8x8xf32>
      %44 = arith.truncf %43 : vector<8x8xf32> to vector<8x8xbf16>
      %c0_41 = arith.constant 0 : index
      %c0_42 = arith.constant 0 : index
      %c0_43 = arith.constant 0 : index
      %45 = vector.load %arg6[%c0_41, %c0_42, %c0_43] : memref<1x8x32xbf16, #tpu.memory_space<vmem>>, vector<1x8x8xbf16>
      %46 = vector.shape_cast %45 : vector<1x8x8xbf16> to vector<8x8xbf16>
      %47 = vector.shape_cast %44 : vector<8x8xbf16> to vector<1x8x8xbf16>
      tpu.vector_store %arg6[%c0_41, %c0_42, %c0_43], %47 {strides = array<i32>} : memref<1x8x32xbf16, #tpu.memory_space<vmem>>, vector<1x8x8xbf16>,
      %c1 = arith.constant 1 : index
      %c0_44 = arith.constant 0 : index
      %c0_45 = arith.constant 0 : index
      %48 = vector.load %arg9[%c1, %c0_44, %c0_45] : memref<4x8x8xf32, #tpu.memory_space<vmem>>, vector<1x8x8xf32>
      %49 = vector.shape_cast %48 : vector<1x8x8xf32> to vector<8x8xf32>
      %50 = vector.extract_strided_slice %37 {offsets = [1, 0, 0], sizes = [1, 8, 1], strides = [1, 1, 1]} : vector<4x8x1xf32> to vector<1x8x1xf32>
      %51 = vector.shape_cast %50 : vector<1x8x1xf32> to vector<8x1xf32>
      %52 = vector.broadcast %51 : vector<8x1xf32> to vector<8x8xf32>
      %53 = arith.mulf %49, %52 : vector<8x8xf32>
      %54 = arith.truncf %53 : vector<8x8xf32> to vector<8x8xbf16>
      %c0_46 = arith.constant 0 : index
      %c0_47 = arith.constant 0 : index
      %c8 = arith.constant 8 : index
      %55 = vector.load %arg6[%c0_46, %c0_47, %c8] : memref<1x8x32xbf16, #tpu.memory_space<vmem>>, vector<1x8x8xbf16>
      %56 = vector.shape_cast %55 : vector<1x8x8xbf16> to vector<8x8xbf16>
      %57 = vector.shape_cast %54 : vector<8x8xbf16> to vector<1x8x8xbf16>
      tpu.vector_store %arg6[%c0_46, %c0_47, %c8], %57 {strides = array<i32>} : memref<1x8x32xbf16, #tpu.memory_space<vmem>>, vector<1x8x8xbf16>,
      %c2 = arith.constant 2 : index
      %c0_48 = arith.constant 0 : index
      %c0_49 = arith.constant 0 : index
      %58 = vector.load %arg9[%c2, %c0_48, %c0_49] : memref<4x8x8xf32, #tpu.memory_space<vmem>>, vector<1x8x8xf32>
      %59 = vector.shape_cast %58 : vector<1x8x8xf32> to vector<8x8xf32>
      %60 = vector.extract_strided_slice %37 {offsets = [2, 0, 0], sizes = [1, 8, 1], strides = [1, 1, 1]} : vector<4x8x1xf32> to vector<1x8x1xf32>
      %61 = vector.shape_cast %60 : vector<1x8x1xf32> to vector<8x1xf32>
      %62 = vector.broadcast %61 : vector<8x1xf32> to vector<8x8xf32>
      %63 = arith.mulf %59, %62 : vector<8x8xf32>
      %64 = arith.truncf %63 : vector<8x8xf32> to vector<8x8xbf16>
      %c0_50 = arith.constant 0 : index
      %c0_51 = arith.constant 0 : index
      %c16 = arith.constant 16 : index
      %65 = vector.load %arg6[%c0_50, %c0_51, %c16] : memref<1x8x32xbf16, #tpu.memory_space<vmem>>, vector<1x8x8xbf16>
      %66 = vector.shape_cast %65 : vector<1x8x8xbf16> to vector<8x8xbf16>
      %67 = vector.shape_cast %64 : vector<8x8xbf16> to vector<1x8x8xbf16>
      tpu.vector_store %arg6[%c0_50, %c0_51, %c16], %67 {strides = array<i32>} : memref<1x8x32xbf16, #tpu.memory_space<vmem>>, vector<1x8x8xbf16>,
      %c3 = arith.constant 3 : index
      %c0_52 = arith.constant 0 : index
      %c0_53 = arith.constant 0 : index
      %68 = vector.load %arg9[%c3, %c0_52, %c0_53] : memref<4x8x8xf32, #tpu.memory_space<vmem>>, vector<1x8x8xf32>
      %69 = vector.shape_cast %68 : vector<1x8x8xf32> to vector<8x8xf32>
      %70 = vector.extract_strided_slice %37 {offsets = [3, 0, 0], sizes = [1, 8, 1], strides = [1, 1, 1]} : vector<4x8x1xf32> to vector<1x8x1xf32>
      %71 = vector.shape_cast %70 : vector<1x8x1xf32> to vector<8x1xf32>
      %72 = vector.broadcast %71 : vector<8x1xf32> to vector<8x8xf32>
      %73 = arith.mulf %69, %72 : vector<8x8xf32>
      %74 = arith.truncf %73 : vector<8x8xf32> to vector<8x8xbf16>
      %c0_54 = arith.constant 0 : index
      %c0_55 = arith.constant 0 : index
      %c24 = arith.constant 24 : index
      %75 = vector.load %arg6[%c0_54, %c0_55, %c24] : memref<1x8x32xbf16, #tpu.memory_space<vmem>>, vector<1x8x8xbf16>
      %76 = vector.shape_cast %75 : vector<1x8x8xbf16> to vector<8x8xbf16>
      %77 = vector.shape_cast %74 : vector<8x8xbf16> to vector<1x8x8xbf16>
      tpu.vector_store %arg6[%c0_54, %c0_55, %c24], %77 {strides = array<i32>} : memref<1x8x32xbf16, #tpu.memory_space<vmem>>, vector<1x8x8xbf16>,
    } else {
    }
    return
  }
  func.func @transform_0(%arg0: i32, %arg1: i32, %arg2: i32) -> (i32, i32, i32, i32) {
    %c0_i32 = arith.constant 0 : i32
    %c0_i32_0 = arith.constant 0 : i32
    %c0_i32_1 = arith.constant 0 : i32
    return %arg0, %c0_i32, %arg1, %c0_i32_0 : i32, i32, i32, i32
  }
  func.func @transform_1(%arg0: i32, %arg1: i32, %arg2: i32) -> (i32, i32, i32, i32) {
    %c0_i32 = arith.constant 0 : i32
    %c0_i32_0 = arith.constant 0 : i32
    %c0_i32_1 = arith.constant 0 : i32
    return %arg0, %c0_i32, %arg2, %c0_i32_0 : i32, i32, i32, i32
  }
  func.func @transform_2(%arg0: i32, %arg1: i32, %arg2: i32) -> (i32, i32, i32, i32) {
    %c0_i32 = arith.constant 0 : i32
    %c0_i32_0 = arith.constant 0 : i32
    %c0_i32_1 = arith.constant 0 : i32
    return %arg0, %c0_i32, %arg2, %c0_i32_0 : i32, i32, i32, i32
  }
  func.func @transform_3(%arg0: i32, %arg1: i32, %arg2: i32) -> (i32, i32, i32) {
    %c0_i32 = arith.constant 0 : i32
    %c0_i32_0 = arith.constant 0 : i32
    return %arg0, %arg1, %c0_i32 : i32, i32, i32
  }
}

module attributes {stable_mosaic.version = 11 : i64} {
  func.func @linear_kernel(%arg0: i32, %arg1: i32, %arg2: i32, %arg3: memref<16x32xbf16, #tpu.memory_space<vmem>>, %arg4: memref<32x32xbf16, #tpu.memory_space<vmem>>, %arg5: memref<1x32xf32, #tpu.memory_space<vmem>>, %arg6: memref<16x32xf32, #tpu.memory_space<vmem>>, %arg7: memref<16x32xf32, #tpu.memory_space<vmem>>) attributes {dimension_semantics = [#tpu.dimension_semantics<parallel>, #tpu.dimension_semantics<parallel>, #tpu.dimension_semantics<arbitrary>], iteration_bounds = array<i64: 1, 1, 1>, scalar_prefetch = 0 : i64, scratch_operands = 1 : i64, tpu.core_type = #tpu.core_type<tc>, window_params = [{transform_indices = @transform_0, window_bounds = array<i64: 16, 32>}, {transform_indices = @transform_1, window_bounds = array<i64: 32, 32>}, {transform_indices = @transform_2, window_bounds = array<i64: 1, 32>}, {transform_indices = @transform_3, window_bounds = array<i64: 16, 32>}]} {
    %c0_i32 = arith.constant 0 : i32
    %0 = arith.cmpi eq, %arg2, %c0_i32 : i32
    %1 = arith.extui %0 : i1 to i32
    %c0_i32_0 = arith.constant 0 : i32
    %2 = arith.cmpi ne, %1, %c0_i32_0 : i32
    scf.if %2 {
      %cst_10 = arith.constant 0.000000e+00 : f32
      %12 = vector.broadcast %cst_10 : f32 to vector<16x32xf32>
      %c0_11 = arith.constant 0 : index
      %c0_12 = arith.constant 0 : index
      %13 = vector.load %arg7[%c0_11, %c0_12] : memref<16x32xf32, #tpu.memory_space<vmem>>, vector<16x32xf32>
      tpu.vector_store %arg7[%c0_11, %c0_12], %12 {strides = array<i32>} : memref<16x32xf32, #tpu.memory_space<vmem>>, vector<16x32xf32>,
    } else {
    }
    %c0 = arith.constant 0 : index
    %c0_1 = arith.constant 0 : index
    %3 = vector.load %arg7[%c0, %c0_1] : memref<16x32xf32, #tpu.memory_space<vmem>>, vector<16x32xf32>
    %c0_2 = arith.constant 0 : index
    %c0_3 = arith.constant 0 : index
    %4 = vector.load %arg3[%c0_2, %c0_3] : memref<16x32xbf16, #tpu.memory_space<vmem>>, vector<16x32xbf16>
    %c0_4 = arith.constant 0 : index
    %c0_5 = arith.constant 0 : index
    %5 = vector.load %arg4[%c0_4, %c0_5] : memref<32x32xbf16, #tpu.memory_space<vmem>>, vector<32x32xbf16>
    %cst = arith.constant dense<0.000000e+00> : vector<16x32xf32>
    %6 = tpu.matmul %4, %5, %cst {dimension_numbers = #tpu.dot_dimension_numbers<[1], [1], [0], [0], [0, 0, 1, 0], [], []>} : vector<16x32xbf16>, vector<32x32xbf16>, vector<16x32xf32> -> vector<16x32xf32>
    %7 = arith.addf %3, %6 : vector<16x32xf32>
    %c0_6 = arith.constant 0 : index
    %c0_7 = arith.constant 0 : index
    %8 = vector.load %arg7[%c0_6, %c0_7] : memref<16x32xf32, #tpu.memory_space<vmem>>, vector<16x32xf32>
    tpu.vector_store %arg7[%c0_6, %c0_7], %7 {strides = array<i32>} : memref<16x32xf32, #tpu.memory_space<vmem>>, vector<16x32xf32>,
    %c0_i32_8 = arith.constant 0 : i32
    %9 = arith.cmpi eq, %arg2, %c0_i32_8 : i32
    %10 = arith.extui %9 : i1 to i32
    %c0_i32_9 = arith.constant 0 : i32
    %11 = arith.cmpi ne, %10, %c0_i32_9 : i32
    scf.if %11 {
      %c0_10 = arith.constant 0 : index
      %c0_11 = arith.constant 0 : index
      %12 = vector.load %arg7[%c0_10, %c0_11] : memref<16x32xf32, #tpu.memory_space<vmem>>, vector<16x32xf32>
      %c0_12 = arith.constant 0 : index
      %c0_13 = arith.constant 0 : index
      %13 = vector.load %arg5[%c0_12, %c0_13] : memref<1x32xf32, #tpu.memory_space<vmem>>, vector<1x32xf32>
      %14 = vector.broadcast %13 : vector<1x32xf32> to vector<16x32xf32>
      %15 = arith.addf %12, %14 : vector<16x32xf32>
      %c0_14 = arith.constant 0 : index
      %c0_15 = arith.constant 0 : index
      %16 = vector.load %arg6[%c0_14, %c0_15] : memref<16x32xf32, #tpu.memory_space<vmem>>, vector<16x32xf32>
      tpu.vector_store %arg6[%c0_14, %c0_15], %15 {strides = array<i32>} : memref<16x32xf32, #tpu.memory_space<vmem>>, vector<16x32xf32>,
    } else {
    }
    return
  }
  func.func @transform_0(%arg0: i32, %arg1: i32, %arg2: i32) -> (i32, i32) {
    %c0_i32 = arith.constant 0 : i32
    return %arg0, %arg2 : i32, i32
  }
  func.func @transform_1(%arg0: i32, %arg1: i32, %arg2: i32) -> (i32, i32) {
    %c0_i32 = arith.constant 0 : i32
    return %arg1, %arg2 : i32, i32
  }
  func.func @transform_2(%arg0: i32, %arg1: i32, %arg2: i32) -> (i32, i32) {
    %c0_i32 = arith.constant 0 : i32
    %c0_i32_0 = arith.constant 0 : i32
    return %c0_i32, %arg1 : i32, i32
  }
  func.func @transform_3(%arg0: i32, %arg1: i32, %arg2: i32) -> (i32, i32) {
    %c0_i32 = arith.constant 0 : i32
    return %arg0, %arg1 : i32, i32
  }
}

</mosaic_0001>

<llo_original>
// kernel: cross_attention.5
$region0: #{cross_attention.5}
  #allocation0 [shape = 'u32[]', space=smem, size = 0x4, offset = 0x4, fixed_abs, tag = 'smem constant byte address 0x4 - core index']
  #allocation1 [shape = 'u32[144,128]{1,0:T(1,128)}', space=vmem, size = 0x12000, scoped, tag = 'internal scratch']
  #allocation2 [shape = 'f32[16,32]{1,0:T(8,128)}', space=vmem, size = 0x2000, scoped, tag = 'scratch operand']
  %s0 = inlined_call_operand.vmem [shape: bf16[16,32], index: 0, kind: input, shape index: {}]
  %s1 = inlined_call_operand.vmem [shape: bf16[32,32], index: 1, kind: input, shape index: {}]
  %s2 = inlined_call_operand.vmem [shape: f32[1,32], index: 2, kind: input, shape index: {}]
  %s3 = inlined_call_operand.vmem [shape: bf16[16,32], index: 3, kind: output, shape index: {}]
  %s4 = sld [smem:[#allocation0]]
  $region30: #{cross_attention.5} parent=0
    _
  %s6 = ssub.s32 1, %s4
  %s7 = scalar_select 0, %s6, %s4
  // Predicated region
  $region2: #{cross_attention.5} parent=0 // pred_check
    _
  $region3: #{cross_attention.5} parent=0 // pred_check_branch
    %9 = sbr.rel (0) target = $region5
  $region4: #{cross_attention.5} parent=0 // pred_region
    _
  $region5: #{cross_attention.5} parent=0 // pred_fallthru
    _
  // Predicated region
  $region6: #{cross_attention.5} parent=0 // pred_check
    _
  $region7: #{cross_attention.5} parent=0 // pred_check_branch
    %11 = sbr.rel (0) target = $region9
  $region8: #{cross_attention.5} parent=0 // pred_region
    _
  $region9: #{cross_attention.5} parent=0 // pred_fallthru
    _
  // Predicated region
  $region10: #{cross_attention.5} parent=0 // pred_check
    _
  $region11: #{cross_attention.5} parent=0 // pred_check_branch
    %13 = sbr.rel (0) target = $region13
  $region12: #{cross_attention.5} parent=0 // pred_region
    _
  $region13: #{cross_attention.5} parent=0 // pred_fallthru
    _
  %p15 = scmp.eq.s32.totalorder 0, 0
  // Predicated region
  $region14: #{cross_attention.5} parent=0 // pred_check
    %p16 = pneg %p15
  $region15: #{cross_attention.5} parent=0 // pred_check_branch
    %18 = sbr.rel (%p16) target = $region17
  $region16: #{cross_attention.5} parent=0 // pred_region
    %vm19 = vcmask 261120
    %20 = vst.msk [vmem:[#allocation2] sm:$0xff] %vm19, 0.0
    %21 = vst.msk [vmem:[#allocation2 + $0x8] sm:$0xff] %vm19, 0.0
  $region17: #{cross_attention.5} parent=0 // pred_fallthru
    _
  %v22 = vld [vmem:[#allocation2] sm:$0xff]
  %v23 = vld [vmem:[#allocation2 + $0x8] sm:$0xff]
  %v24 = vld [vmem:[%s0] sm:$0xf]
  %v25 = vld [vmem:[%s0 + $0x4] sm:$0xf]
  %v26 = vld [vmem:[%s1] sm:$0xf]
  %v27 = vld [vmem:[%s1 + $0x4] sm:$0xf]
  %v28 = vld [vmem:[%s1 + $0x8] sm:$0xf]
  %v29 = vld [vmem:[%s1 + $0xc] sm:$0xf]
  %v32 = vunpack.c.l.b16 %v24
  %v33 = vunpack.c.l.b16 %v25
  %v34 = vpack.c.b16 %v33, %v32
  %v39 = vunpack.c.l.b16 %v26
  %v40 = vunpack.c.l.b16 %v27
  %v41 = vunpack.c.l.b16 %v28
  %v42 = vunpack.c.l.b16 %v29
  %v43 = vpack.c.b16 %v40, %v39
  %v44 = vpack.c.b16 %v42, %v41
  %vm45 = vcmask 261120
  %v47 = vsel %vm45, %v34, 0
  %v50 = vsel %vm45, %v43, 0
  %v53 = vsel %vm45, %v44, 0
  %55 = vmatprep.subr.bf16.mxu0 0
  %56 = vmatpush1.bf16.xpose.msra.mxu0 0
  %57 = vmatprep.subr.bf16.mxu0 0
  %58 = vmatpush1.bf16.xpose.msra.mxu0 0
  %59 = vmatprep.subr.bf16.mxu0 0
  %60 = vmatpush1.bf16.xpose.msra.mxu0 0
  %61 = vmatprep.subr.bf16.mxu0 0
  %62 = vmatpush1.bf16.xpose.msra.mxu0 0
  %63 = vmatprep.subr.bf16.mxu0 0
  %64 = vmatpush1.bf16.xpose.msra.mxu0 0
  %65 = vmatprep.subr.bf16.mxu0 0
  %66 = vmatpush1.bf16.xpose.msra.mxu0 0
  %67 = vmatprep.subr.bf16.mxu0 0
  %68 = vmatpush1.bf16.xpose.msra.mxu0 %v53
  %69 = vmatprep.subr.bf16.mxu0 0
  %70 = vmatpush1.bf16.xpose.msra.mxu0 %v50
  %71 = vmatprep.subr.bf16.mxu0 0
  %72 = vmatpush2.bf16.xpose.msra.mxu0 0
  %73 = vmatprep.subr.bf16.mxu0 0
  %74 = vmatpush2.bf16.xpose.msra.mxu0 0
  %75 = vmatprep.subr.bf16.mxu0 0
  %76 = vmatpush2.bf16.xpose.msra.mxu0 0
  %77 = vmatprep.subr.bf16.mxu0 0
  %78 = vmatpush2.bf16.xpose.msra.mxu0 0
  %79 = vmatprep.subr.bf16.mxu0 0
  %80 = vmatpush2.bf16.xpose.msra.mxu0 0
  %81 = vmatprep.subr.bf16.mxu0 0
  %82 = vmatpush2.bf16.xpose.msra.mxu0 0
  %83 = vmatprep.subr.bf16.mxu0 0
  %84 = vmatpush2.bf16.xpose.msra.mxu0 0
  %85 = vmatprep.subr.bf16.mxu0 0
  %86 = vmatpush2.bf16.xpose.msra.mxu0 0
  %87 = vmatprep.mubr.bf16.mxu0 0
  %88 = vmatmul.mubr.bf16.gmra.mxu0 %v47
  %v89 = vpop.f32.mrf.mxu0
  %v90 = vadd.f32 0.0, %v89
  %v91 = vpop.f32.mrf.mxu0
  %v92 = vpop.f32.mrf.mxu0
  %v93 = vadd.f32 0.0, %v92
  %v94 = vpop.f32.mrf.mxu0
  %95 = vdwg.mxu0
  %v96 = vadd.f32 %v22, %v90
  %v97 = vadd.f32 %v23, %v93
  %98 = vst.msk [vmem:[#allocation2] sm:$0xff] %vm45, %v96
  %99 = vst.msk [vmem:[#allocation2 + $0x8] sm:$0xff] %vm45, %v97
  // Predicated region
  $region18: #{cross_attention.5} parent=0 // pred_check
    %p100 = pneg %p15
  $region19: #{cross_attention.5} parent=0 // pred_check_branch
    %102 = sbr.rel (%p100) target = $region21
  $region20: #{cross_attention.5} parent=0 // pred_region
    %v103 = vld [vmem:[#allocation2] sm:$0xff]
    %v104 = vld [vmem:[#allocation2 + $0x8] sm:$0xff]
    %v105 = vld [vmem:[%s2] sm:$0x1]
    %v107 = vlaneseq
    %v108 = vshrl.u32 %v107, 7
    %v109 = vsub.s32 0, %v108
    %v110 = vrot.slane %v105, %v109
    %v112 = vadd.f32 %v103, %v110
    %v113 = vadd.f32 %v104, %v110
    %v114 = vpack.c.bf16 %v113, %v112
    %v116 = vunpack.c.l.b16 %v114
    %v117 = vunpack.c.h.b16 %v114
    %v118 = vpack.c.b16 %v116, %v116
    %v119 = vpack.c.b16 %v117, %v117
    %vm122 = vcmask 257024
    %123 = vst.msk [vmem:[%s3] sm:$0xf] %vm122, %v118
    %124 = vst.msk [vmem:[%s3 + $0x4] sm:$0xf] %vm122, %v119
  $region21: #{cross_attention.5} parent=0 // pred_fallthru
    _
  // Predicated region
  $region22: #{cross_attention.5} parent=0 // pred_check
    _
  $region23: #{cross_attention.5} parent=0 // pred_check_branch
    %126 = sbr.rel (0) target = $region25
  $region24: #{cross_attention.5} parent=0 // pred_region
    _
  $region25: #{cross_attention.5} parent=0 // pred_fallthru
    _
  // Predicated region
  $region26: #{cross_attention.5} parent=0 // pred_check
    _
  $region27: #{cross_attention.5} parent=0 // pred_check_branch
    %128 = sbr.rel (0) target = $region29
  $region28: #{cross_attention.5} parent=0 // pred_region
    _
  $region29: #{cross_attention.5} parent=0 // pred_fallthru
    _

// kernel: cross_attention.9
$region0: #{cross_attention.9}
  #allocation0 [shape = 'u32[]', space=smem, size = 0x4, offset = 0x4, fixed_abs, tag = 'smem constant byte address 0x4 - core index']
  #allocation1 [shape = 'u32[144,128]{1,0:T(1,128)}', space=vmem, size = 0x12000, scoped, tag = 'internal scratch']
  #allocation2 [shape = 'f32[16,32]{1,0:T(8,128)}', space=vmem, size = 0x2000, scoped, tag = 'scratch operand']
  %s0 = inlined_call_operand.vmem [shape: bf16[16,32], index: 0, kind: input, shape index: {}]
  %s1 = inlined_call_operand.vmem [shape: bf16[32,32], index: 1, kind: input, shape index: {}]
  %s2 = inlined_call_operand.vmem [shape: f32[1,32], index: 2, kind: input, shape index: {}]
  %s3 = inlined_call_operand.hbm [shape: f32[16,32], index: 3, kind: output, shape index: {}]
  %s4 = sld [smem:[#allocation0]]
  $region30: #{cross_attention.9} parent=0
    _
  %s6 = ssub.s32 1, %s4
  %s7 = scalar_select 0, %s6, %s4
  $region1: #{cross_attention.9} parent=0
    #allocation3 [shape = 'u8[8192]{0}', space=vmem, size = 0x2000, scoped, tag = 'output window, operand 0, single buffered']
    #allocation4 [shape = 's32[1]{0}', space=sflag, size = 0x4, scoped, tag = 'scoped memory for cross_attention.9']
    %8 = vsyncpa [#allocation4], 0
    // Predicated region
    $region2: #{cross_attention.9} parent=1 // pred_check
      _
    $region3: #{cross_attention.9} parent=1 // pred_check_branch
      %10 = sbr.rel (0) target = $region5
    $region4: #{cross_attention.9} parent=1 // pred_region
      _
    $region5: #{cross_attention.9} parent=1 // pred_fallthru
      _
    // Predicated region
    $region6: #{cross_attention.9} parent=1 // pred_check
      _
    $region7: #{cross_attention.9} parent=1 // pred_check_branch
      %12 = sbr.rel (0) target = $region9
    $region8: #{cross_attention.9} parent=1 // pred_region
      _
    $region9: #{cross_attention.9} parent=1 // pred_fallthru
      _
    // Predicated region
    $region10: #{cross_attention.9} parent=1 // pred_check
      _
    $region11: #{cross_attention.9} parent=1 // pred_check_branch
      %14 = sbr.rel (0) target = $region13
    $region12: #{cross_attention.9} parent=1 // pred_region
      _
    $region13: #{cross_attention.9} parent=1 // pred_fallthru
      _
    %p16 = scmp.eq.s32.totalorder 0, 0
    // Predicated region
    $region14: #{cross_attention.9} parent=1 // pred_check
      %p17 = pneg %p16
    $region15: #{cross_attention.9} parent=1 // pred_check_branch
      %19 = sbr.rel (%p17) target = $region17
    $region16: #{cross_attention.9} parent=1 // pred_region
      %vm20 = vcmask 261120
      %21 = vst.msk [vmem:[#allocation2] sm:$0xff] %vm20, 0.0
      %22 = vst.msk [vmem:[#allocation2 + $0x8] sm:$0xff] %vm20, 0.0
    $region17: #{cross_attention.9} parent=1 // pred_fallthru
      _
    %v23 = vld [vmem:[#allocation2] sm:$0xff]
    %v24 = vld [vmem:[#allocation2 + $0x8] sm:$0xff]
    %v25 = vld [vmem:[%s0] sm:$0xf]
    %v26 = vld [vmem:[%s0 + $0x4] sm:$0xf]
    %v27 = vld [vmem:[%s1] sm:$0xf]
    %v28 = vld [vmem:[%s1 + $0x4] sm:$0xf]
    %v29 = vld [vmem:[%s1 + $0x8] sm:$0xf]
    %v30 = vld [vmem:[%s1 + $0xc] sm:$0xf]
    %v33 = vunpack.c.l.b16 %v25
    %v34 = vunpack.c.l.b16 %v26
    %v35 = vpack.c.b16 %v34, %v33
    %v40 = vunpack.c.l.b16 %v27
    %v41 = vunpack.c.l.b16 %v28
    %v42 = vunpack.c.l.b16 %v29
    %v43 = vunpack.c.l.b16 %v30
    %v44 = vpack.c.b16 %v41, %v40
    %v45 = vpack.c.b16 %v43, %v42
    %vm46 = vcmask 261120
    %v48 = vsel %vm46, %v35, 0
    %v51 = vsel %vm46, %v44, 0
    %v54 = vsel %vm46, %v45, 0
    %56 = vmatprep.subr.bf16.mxu0 0
    %57 = vmatpush1.bf16.xpose.msra.mxu0 0
    %58 = vmatprep.subr.bf16.mxu0 0
    %59 = vmatpush1.bf16.xpose.msra.mxu0 0
    %60 = vmatprep.subr.bf16.mxu0 0
    %61 = vmatpush1.bf16.xpose.msra.mxu0 0
    %62 = vmatprep.subr.bf16.mxu0 0
    %63 = vmatpush1.bf16.xpose.msra.mxu0 0
    %64 = vmatprep.subr.bf16.mxu0 0
    %65 = vmatpush1.bf16.xpose.msra.mxu0 0
    %66 = vmatprep.subr.bf16.mxu0 0
    %67 = vmatpush1.bf16.xpose.msra.mxu0 0
    %68 = vmatprep.subr.bf16.mxu0 0
    %69 = vmatpush1.bf16.xpose.msra.mxu0 %v54
    %70 = vmatprep.subr.bf16.mxu0 0
    %71 = vmatpush1.bf16.xpose.msra.mxu0 %v51
    %72 = vmatprep.subr.bf16.mxu0 0
    %73 = vmatpush2.bf16.xpose.msra.mxu0 0
    %74 = vmatprep.subr.bf16.mxu0 0
    %75 = vmatpush2.bf16.xpose.msra.mxu0 0
    %76 = vmatprep.subr.bf16.mxu0 0
    %77 = vmatpush2.bf16.xpose.msra.mxu0 0
    %78 = vmatprep.subr.bf16.mxu0 0
    %79 = vmatpush2.bf16.xpose.msra.mxu0 0
    %80 = vmatprep.subr.bf16.mxu0 0
    %81 = vmatpush2.bf16.xpose.msra.mxu0 0
    %82 = vmatprep.subr.bf16.mxu0 0
    %83 = vmatpush2.bf16.xpose.msra.mxu0 0
    %84 = vmatprep.subr.bf16.mxu0 0
    %85 = vmatpush2.bf16.xpose.msra.mxu0 0
    %86 = vmatprep.subr.bf16.mxu0 0
    %87 = vmatpush2.bf16.xpose.msra.mxu0 0
    %88 = vmatprep.mubr.bf16.mxu0 0
    %89 = vmatmul.mubr.bf16.gmra.mxu0 %v48
    %v90 = vpop.f32.mrf.mxu0
    %v91 = vadd.f32 0.0, %v90
    %v92 = vpop.f32.mrf.mxu0
    %v93 = vpop.f32.mrf.mxu0
    %v94 = vadd.f32 0.0, %v93
    %v95 = vpop.f32.mrf.mxu0
    %96 = vdwg.mxu0
    %v97 = vadd.f32 %v23, %v91
    %v98 = vadd.f32 %v24, %v94
    %99 = vst.msk [vmem:[#allocation2] sm:$0xff] %vm46, %v97
    %100 = vst.msk [vmem:[#allocation2 + $0x8] sm:$0xff] %vm46, %v98
    // Predicated region
    $region18: #{cross_attention.9} parent=1 // pred_check
      %p101 = pneg %p16
    $region19: #{cross_attention.9} parent=1 // pred_check_branch
      %103 = sbr.rel (%p101) target = $region21
    $region20: #{cross_attention.9} parent=1 // pred_region
      %v104 = vld [vmem:[#allocation2] sm:$0xff]
      %v105 = vld [vmem:[#allocation2 + $0x8] sm:$0xff]
      %v106 = vld [vmem:[%s2] sm:$0x1]
      %v108 = vlaneseq
      %v109 = vshrl.u32 %v108, 7
      %v110 = vsub.s32 0, %v109
      %v111 = vrot.slane %v106, %v110
      %v113 = vadd.f32 %v104, %v111
      %v114 = vadd.f32 %v105, %v111
      %115 = vst.msk [vmem:[#allocation3] sm:$0xff] %vm46, %v113
      %116 = vst.msk [vmem:[#allocation3 + $0x8] sm:$0xff] %vm46, %v114
    $region21: #{cross_attention.9} parent=1 // pred_fallthru
      _
    // Predicated region
    $region22: #{cross_attention.9} parent=1 // pred_check
      _
    $region23: #{cross_attention.9} parent=1 // pred_check_branch
      %118 = sbr.rel (0) target = $region25
    $region24: #{cross_attention.9} parent=1 // pred_region
      %s120 = ssub.s32 256, 256
      %121 = vsyncadd [#allocation4], %s120
      %s122 = sshll.u32 [#allocation3], 4
      %s123 = int_to_ptr.vmem [resolvable:$true] %s122
      %128 = dma.vmem_to_hbm [thread:$0]  %s123, 256, %s3, [#allocation4], 128, 128, 8
    $region25: #{cross_attention.9} parent=1 // pred_fallthru
      _
    // Predicated region
    $region26: #{cross_attention.9} parent=1 // pred_check
      _
    $region27: #{cross_attention.9} parent=1 // pred_check_branch
      %130 = sbr.rel (0) target = $region29
    $region28: #{cross_attention.9} parent=1 // pred_region
      %131 = dma.done [#allocation4], 256
    $region29: #{cross_attention.9} parent=1 // pred_fallthru
      _
    %132 = vsyncpa [#allocation4], 1

// kernel: cross_attention.8
$region0: #{cross_attention.8}
  #allocation0 [shape = 'u32[]', space=smem, size = 0x4, offset = 0x4, fixed_abs, tag = 'smem constant byte address 0x4 - core index']
  #allocation1 [shape = 'u32[144,128]{1,0:T(1,128)}', space=vmem, size = 0x12000, scoped, tag = 'internal scratch']
  #allocation2 [shape = 'f32[4,8,1]{2,1,0:T(8,128)}', space=vmem, size = 0x4000, scoped, tag = 'scratch operand']
  #allocation3 [shape = 'f32[4,8,1]{2,1,0:T(8,128)}', space=vmem, size = 0x4000, scoped, tag = 'scratch operand']
  #allocation4 [shape = 'f32[4,8,8]{2,1,0:T(8,128)}', space=vmem, size = 0x4000, scoped, tag = 'scratch operand']
  %s0 = inlined_call_operand.vmem [shape: bf16[2,4,8,8], index: 0, kind: input, shape index: {}]
  %s1 = inlined_call_operand.vmem [shape: bf16[2,4,8,8], index: 1, kind: input, shape index: {}]
  %s2 = inlined_call_operand.vmem [shape: bf16[2,4,8,8], index: 2, kind: input, shape index: {}]
  %s3 = inlined_call_operand.vmem [shape: bf16[2,8,32], index: 3, kind: output, shape index: {}]
  %s4 = sld [smem:[#allocation0]]
  $region53: #{cross_attention.8} parent=0
    _
  %s6 = ssub.s32 1, %s4
  %s7 = scalar_select 0, %s6, %s4
  loop: start=0, step=1, limit=4
  $region2: #{cross_attention.8} parent=0 // loop_pre_header
    _
  $region3: #{cross_attention.8} parent=0 // loop_header
    %s9 = sphi 0, %s13
    %p10 = scmp.ge.s32.totalorder %s9, 4
    %s16 = sphi 0, %s35
    %s17 = sphi 0, %s31
    %s18 = sphi 0, %s27
    %s19 = sphi 0, %s16
    %s20 = sphi 0, %s17
    %s21 = sphi 0, %s18
    %s22 = sphi 0, %s19
    %s23 = sphi 0, %s20
    %s24 = sphi 0, %s21
    %s40 = sphi 0, %s42
    %s43 = sphi 0, %s40
    %s44 = sphi 0, %s43
    %s60 = sphi 0, %s44
    %s68 = sphi 0, %s70
    %s71 = sphi 0, %s68
    %s72 = sphi 0, %s71
    %s88 = sphi 0, %s72
    %s96 = sphi 0, %s98
    %s99 = sphi 0, %s96
    %s100 = sphi 0, %s99
    %s116 = sphi 0, %s100
    %s124 = sphi 0, %s126
    %s127 = sphi 0, %s124
    %s128 = sphi 0, %s127
    %s144 = sphi 0, %s128
  $region4: #{cross_attention.8} parent=0 // loop_header_branch
    %12 = sbr.rel (%p10) target = $region8
  $region5: #{cross_attention.8} parent=0 // loop_body
    %s14 = ssub.s32 %s9, 1
    %s15 = ssub.s32 %s9, 2
    %s25 = sadd.s32 1, %s18
    %p26 = scmp.ge.s32.totalorder %s25, 1
    %s27 = scalar_select %p26, 0, %s25
    %s28 = sadd.s32 1, %s17
    %s29 = scalar_select %p26, %s28, %s17
    %p30 = scmp.ge.s32.totalorder %s29, 1
    %s31 = scalar_select %p30, 0, %s29
    %s32 = sadd.s32 1, %s16
    %s33 = scalar_select %p30, %s32, %s16
    %p34 = scmp.ge.s32.totalorder %s33, 2
    %s35 = scalar_select %p34, 0, %s33
    %s36 = ssub.s32 %s16, %s35
    %s37 = ssub.s32 %s17, %s31
    %s38 = sor.u32 %s36, %s37
    %p39 = scmp.eq.s32.totalorder %s38, 0
    %s41 = sadd.s32 %s40, 1
    %s42 = scalar_select %p39, %s40, %s41
    %p45 = pneg %p39
    %p46 = scmp.eq.s32.totalorder %s9, 1
    %p47 = por %p45, %p46
    %p48 = scmp.ne.s32.totalorder %s40, %s43
    %p49 = scmp.eq.s32.totalorder %s9, 0
    %p50 = por %p48, %p49
    %p51 = scmp.ne.s32.totalorder %s40, %s43
    %p52 = scmp.eq.s32.totalorder %s14, 1
    %p53 = por %p51, %p52
    %p54 = scmp.ne.s32.totalorder %s43, %s44
    %p55 = scmp.eq.s32.totalorder %s14, 0
    %p56 = por %p54, %p55
    %p57 = scmp.ne.s32.totalorder %s43, %s44
    %p58 = scmp.eq.s32.totalorder %s15, 1
    %p59 = por %p57, %p58
    %p61 = scmp.ne.s32.totalorder %s44, %s60
    %p62 = scmp.eq.s32.totalorder %s15, 0
    %p63 = por %p61, %p62
    %s64 = ssub.s32 %s16, %s35
    %s65 = ssub.s32 %s18, %s27
    %s66 = sor.u32 %s64, %s65
    %p67 = scmp.eq.s32.totalorder %s66, 0
    %s69 = sadd.s32 %s68, 1
    %s70 = scalar_select %p67, %s68, %s69
    %p73 = pneg %p67
    %p74 = scmp.eq.s32.totalorder %s9, 1
    %p75 = por %p73, %p74
    %p76 = scmp.ne.s32.totalorder %s68, %s71
    %p77 = scmp.eq.s32.totalorder %s9, 0
    %p78 = por %p76, %p77
    %p79 = scmp.ne.s32.totalorder %s68, %s71
    %p80 = scmp.eq.s32.totalorder %s14, 1
    %p81 = por %p79, %p80
    %p82 = scmp.ne.s32.totalorder %s71, %s72
    %p83 = scmp.eq.s32.totalorder %s14, 0
    %p84 = por %p82, %p83
    %p85 = scmp.ne.s32.totalorder %s71, %s72
    %p86 = scmp.eq.s32.totalorder %s15, 1
    %p87 = por %p85, %p86
    %p89 = scmp.ne.s32.totalorder %s72, %s88
    %p90 = scmp.eq.s32.totalorder %s15, 0
    %p91 = por %p89, %p90
    %s92 = ssub.s32 %s16, %s35
    %s93 = ssub.s32 %s18, %s27
    %s94 = sor.u32 %s92, %s93
    %p95 = scmp.eq.s32.totalorder %s94, 0
    %s97 = sadd.s32 %s96, 1
    %s98 = scalar_select %p95, %s96, %s97
    %p101 = pneg %p95
    %p102 = scmp.eq.s32.totalorder %s9, 1
    %p103 = por %p101, %p102
    %p104 = scmp.ne.s32.totalorder %s96, %s99
    %p105 = scmp.eq.s32.totalorder %s9, 0
    %p106 = por %p104, %p105
    %p107 = scmp.ne.s32.totalorder %s96, %s99
    %p108 = scmp.eq.s32.totalorder %s14, 1
    %p109 = por %p107, %p108
    %p110 = scmp.ne.s32.totalorder %s99, %s100
    %p111 = scmp.eq.s32.totalorder %s14, 0
    %p112 = por %p110, %p111
    %p113 = scmp.ne.s32.totalorder %s99, %s100
    %p114 = scmp.eq.s32.totalorder %s15, 1
    %p115 = por %p113, %p114
    %p117 = scmp.ne.s32.totalorder %s100, %s116
    %p118 = scmp.eq.s32.totalorder %s15, 0
    %p119 = por %p117, %p118
    %s120 = ssub.s32 %s16, %s35
    %s121 = ssub.s32 %s17, %s31
    %s122 = sor.u32 %s120, %s121
    %p123 = scmp.eq.s32.totalorder %s122, 0
    %s125 = sadd.s32 %s124, 1
    %s126 = scalar_select %p123, %s124, %s125
    %p129 = pneg %p123
    %p130 = scmp.eq.s32.totalorder %s9, 1
    %p131 = por %p129, %p130
    %p132 = scmp.ne.s32.totalorder %s124, %s127
    %p133 = scmp.eq.s32.totalorder %s9, 0
    %p134 = por %p132, %p133
    %p135 = scmp.ne.s32.totalorder %s124, %s127
    %p136 = scmp.eq.s32.totalorder %s14, 1
    %p137 = por %p135, %p136
    %p138 = scmp.ne.s32.totalorder %s127, %s128
    %p139 = scmp.eq.s32.totalorder %s14, 0
    %p140 = por %p138, %p139
    %p141 = scmp.ne.s32.totalorder %s127, %s128
    %p142 = scmp.eq.s32.totalorder %s15, 1
    %p143 = por %p141, %p142
    %p145 = scmp.ne.s32.totalorder %s128, %s144
    %p146 = scmp.eq.s32.totalorder %s15, 0
    %p147 = por %p145, %p146
    %p148 = scmp.le.s32.totalorder 1, %s9
    %p149 = scmp.lt.s32.totalorder %s9, 3
    %p150 = pnand %p148, %p149
    %p151 = pneg %p150
    // Predicated region
    $region9: #{cross_attention.8} parent=5 // pred_check
      _
    $region10: #{cross_attention.8} parent=5 // pred_check_branch
      %153 = sbr.rel (%p150) target = $region12
    $region11: #{cross_attention.8} parent=5 // pred_region
      %s154 = ssub.s32 %s9, 1
    $region12: #{cross_attention.8} parent=5 // pred_fallthru
      _
    %p155 = scmp.lt.s32.totalorder %s9, 2
    // Predicated region
    $region13: #{cross_attention.8} parent=5 // pred_check
      %p156 = pneg %p155
    $region14: #{cross_attention.8} parent=5 // pred_check_branch
      %158 = sbr.rel (%p156) target = $region16
    $region15: #{cross_attention.8} parent=5 // pred_region
      // Predicated region
      $region17: #{cross_attention.8} parent=15 // pred_check
        %p159 = pneg %p50
      $region18: #{cross_attention.8} parent=15 // pred_check_branch
        %161 = sbr.rel (%p159) target = $region20
      $region19: #{cross_attention.8} parent=15 // pred_region
        %p162 = scmp.lt.s32.totalorder %s16, 1
        %s163 = scalar_select %p162, %s16, 1
        %p164 = scmp.lt.s32.totalorder %s17, 0
        %s165 = scalar_select %p164, %s17, 0
        %s166 = smul.addr %s163, 4
        %s167 = sadd.s32 %s165, %s166
        %s168 = smul.addr %s167, 4
        %s169 = scalar_lea.vmem %s0, %s168
      $region20: #{cross_attention.8} parent=15 // pred_fallthru
        _
      // Predicated region
      $region21: #{cross_attention.8} parent=15 // pred_check
        %p170 = pneg %p78
      $region22: #{cross_attention.8} parent=15 // pred_check_branch
        %172 = sbr.rel (%p170) target = $region24
      $region23: #{cross_attention.8} parent=15 // pred_region
        %p173 = scmp.lt.s32.totalorder %s16, 1
        %s174 = scalar_select %p173, %s16, 1
        %p175 = scmp.lt.s32.totalorder %s18, 0
        %s176 = scalar_select %p175, %s18, 0
        %s177 = smul.addr %s174, 4
        %s178 = sadd.s32 %s176, %s177
        %s179 = smul.addr %s178, 4
        %s180 = scalar_lea.vmem %s1, %s179
      $region24: #{cross_attention.8} parent=15 // pred_fallthru
        _
      // Predicated region
      $region25: #{cross_attention.8} parent=15 // pred_check
        %p181 = pneg %p106
      $region26: #{cross_attention.8} parent=15 // pred_check_branch
        %183 = sbr.rel (%p181) target = $region28
      $region27: #{cross_attention.8} parent=15 // pred_region
        %p184 = scmp.lt.s32.totalorder %s16, 1
        %s185 = scalar_select %p184, %s16, 1
        %p186 = scmp.lt.s32.totalorder %s18, 0
        %s187 = scalar_select %p186, %s18, 0
        %s188 = smul.addr %s185, 4
        %s189 = sadd.s32 %s187, %s188
        %s190 = smul.addr %s189, 4
        %s191 = scalar_lea.vmem %s2, %s190
      $region28: #{cross_attention.8} parent=15 // pred_fallthru
        _
    $region16: #{cross_attention.8} parent=5 // pred_fallthru
      _
    %p192 = scmp.le.s32.totalorder 1, %s9
    %p193 = scmp.lt.s32.totalorder %s9, 3
    %p194 = pnand %p192, %p193
    %p195 = pneg %p194
    // Predicated region
    $region29: #{cross_attention.8} parent=5 // pred_check
      _
    $region30: #{cross_attention.8} parent=5 // pred_check_branch
      %197 = sbr.rel (%p194) target = $region32
    $region31: #{cross_attention.8} parent=5 // pred_region
      %s198 = ssub.s32 %s9, 1
      %p199 = scmp.lt.s32.totalorder %s19, 1
      %s200 = scalar_select %p199, %s19, 1
      %p201 = scmp.lt.s32.totalorder %s20, 0
      %s202 = scalar_select %p201, %s20, 0
      %s203 = smul.addr %s200, 4
      %s204 = sadd.s32 %s202, %s203
      %s205 = smul.addr %s204, 4
      %s206 = scalar_lea.vmem %s0, %s205
      %p207 = pneg %p56
      %p208 = pneg %p53
      %p209 = scmp.lt.s32.totalorder %s19, 1
      %s210 = scalar_select %p209, %s19, 1
      %p211 = scmp.lt.s32.totalorder %s21, 0
      %s212 = scalar_select %p211, %s21, 0
      %s213 = smul.addr %s210, 4
      %s214 = sadd.s32 %s212, %s213
      %s215 = smul.addr %s214, 4
      %s216 = scalar_lea.vmem %s1, %s215
      %p217 = pneg %p84
      %p218 = pneg %p81
      %p219 = scmp.lt.s32.totalorder %s19, 1
      %s220 = scalar_select %p219, %s19, 1
      %p221 = scmp.lt.s32.totalorder %s21, 0
      %s222 = scalar_select %p221, %s21, 0
      %s223 = smul.addr %s220, 4
      %s224 = sadd.s32 %s222, %s223
      %s225 = smul.addr %s224, 4
      %s226 = scalar_lea.vmem %s2, %s225
      %p227 = pneg %p112
      %p228 = pneg %p109
      %p229 = pneg %p140
      %p230 = pneg %p137
      %p231 = scmp.lt.s32.totalorder %s19, 1
      %s232 = scalar_select %p231, %s19, 1
      %p233 = scmp.lt.s32.totalorder %s20, 0
      %s234 = scalar_select %p233, %s20, 0
      %s235 = sadd.s32 %s234, %s232
      %s236 = smul.addr %s235, 4
      %s237 = scalar_lea.vmem %s3, %s236
      %p238 = scmp.lt.s32.totalorder %s19, 1
      %s239 = scalar_select %p238, %s19, 1
      %p240 = scmp.lt.s32.totalorder %s20, 0
      %s241 = scalar_select %p240, %s20, 0
      %s242 = smul.addr %s239, 4
      %s243 = sadd.s32 %s241, %s242
      %s244 = smul.addr %s243, 4
      %s245 = scalar_lea.vmem %s0, %s244
      %p246 = scmp.lt.s32.totalorder %s19, 1
      %s247 = scalar_select %p246, %s19, 1
      %p248 = scmp.lt.s32.totalorder %s21, 0
      %s249 = scalar_select %p248, %s21, 0
      %s250 = smul.addr %s247, 4
      %s251 = sadd.s32 %s249, %s250
      %s252 = smul.addr %s251, 4
      %s253 = scalar_lea.vmem %s1, %s252
      %p254 = scmp.lt.s32.totalorder %s19, 1
      %s255 = scalar_select %p254, %s19, 1
      %p256 = scmp.lt.s32.totalorder %s21, 0
      %s257 = scalar_select %p256, %s21, 0
      %s258 = smul.addr %s255, 4
      %s259 = sadd.s32 %s257, %s258
      %s260 = smul.addr %s259, 4
      %s261 = scalar_lea.vmem %s2, %s260
      %p262 = scmp.lt.s32.totalorder %s19, 1
      %s263 = scalar_select %p262, %s19, 1
      %p264 = scmp.lt.s32.totalorder %s20, 0
      %s265 = scalar_select %p264, %s20, 0
      %s266 = sadd.s32 %s265, %s263
      %s267 = smul.addr %s266, 4
      %s268 = scalar_lea.vmem %s3, %s267
      %p270 = scmp.eq.s32.totalorder %s21, 0
      // Predicated region
      $region33: #{cross_attention.8} parent=31 // pred_check
        %p271 = pneg %p270
      $region34: #{cross_attention.8} parent=31 // pred_check_branch
        %273 = sbr.rel (%p271) target = $region36
      $region35: #{cross_attention.8} parent=31 // pred_region
        %vm274 = vcmask 7168
        %275 = vst.msk [vmem:[#allocation2] sm:$0xff] %vm274, -inf
        %276 = vst.msk [vmem:[#allocation2 + $0x8] sm:$0xff] %vm274, -inf
        %277 = vst.msk [vmem:[#allocation2 + $0x10] sm:$0xff] %vm274, -inf
        %278 = vst.msk [vmem:[#allocation2 + $0x18] sm:$0xff] %vm274, -inf
        %279 = vst.msk [vmem:[#allocation3] sm:$0xff] %vm274, 0.0
        %280 = vst.msk [vmem:[#allocation3 + $0x8] sm:$0xff] %vm274, 0.0
        %281 = vst.msk [vmem:[#allocation3 + $0x10] sm:$0xff] %vm274, 0.0
        %282 = vst.msk [vmem:[#allocation3 + $0x18] sm:$0xff] %vm274, 0.0
        %vm283 = vcmask 64512
        %284 = vst.msk [vmem:[#allocation4] sm:$0xff] %vm283, 0.0
        %285 = vst.msk [vmem:[#allocation4 + $0x8] sm:$0xff] %vm283, 0.0
        %286 = vst.msk [vmem:[#allocation4 + $0x10] sm:$0xff] %vm283, 0.0
        %287 = vst.msk [vmem:[#allocation4 + $0x18] sm:$0xff] %vm283, 0.0
      $region36: #{cross_attention.8} parent=31 // pred_fallthru
        _
      %v288 = vld [vmem:[%s245] sm:$0xf]
      %v289 = vld [vmem:[%s245 + $0x4] sm:$0xf]
      %v290 = vld [vmem:[%s245 + $0x8] sm:$0xf]
      %v291 = vld [vmem:[%s245 + $0xc] sm:$0xf]
      %v292 = vld [vmem:[%s253] sm:$0xf]
      %v293 = vld [vmem:[%s253 + $0x4] sm:$0xf]
      %v294 = vld [vmem:[%s253 + $0x8] sm:$0xf]
      %v295 = vld [vmem:[%s253 + $0xc] sm:$0xf]
      %v296 = vld [vmem:[%s261] sm:$0xf]
      %v297 = vld [vmem:[%s261 + $0x4] sm:$0xf]
      %v298 = vld [vmem:[%s261 + $0x8] sm:$0xf]
      %v299 = vld [vmem:[%s261 + $0xc] sm:$0xf]
      %vm300 = vcmask 64512
      %v302 = vsel %vm300, %v288, 0
      %v305 = vsel %vm300, %v292, 0
      %307 = vmatprep.subr.bf16.mxu0 0
      %308 = vmatpush1.bf16.xpose.msra.mxu0 0
      %309 = vmatprep.subr.bf16.mxu0 0
      %310 = vmatpush1.bf16.xpose.msra.mxu0 0
      %311 = vmatprep.subr.bf16.mxu0 0
      %312 = vmatpush1.bf16.xpose.msra.mxu0 0
      %313 = vmatprep.subr.bf16.mxu0 0
      %314 = vmatpush1.bf16.xpose.msra.mxu0 0
      %315 = vmatprep.subr.bf16.mxu0 0
      %316 = vmatpush1.bf16.xpose.msra.mxu0 0
      %317 = vmatprep.subr.bf16.mxu0 0
      %318 = vmatpush1.bf16.xpose.msra.mxu0 0
      %319 = vmatprep.subr.bf16.mxu0 0
      %320 = vmatpush1.bf16.xpose.msra.mxu0 0
      %321 = vmatprep.subr.bf16.mxu0 0
      %322 = vmatpush1.bf16.xpose.msra.mxu0 %v305
      %323 = vmatprep.subr.bf16.mxu0 0
      %324 = vmatpush2.bf16.xpose.msra.mxu0 0
      %325 = vmatprep.subr.bf16.mxu0 0
      %326 = vmatpush2.bf16.xpose.msra.mxu0 0
      %327 = vmatprep.subr.bf16.mxu0 0
      %328 = vmatpush2.bf16.xpose.msra.mxu0 0
      %329 = vmatprep.subr.bf16.mxu0 0
      %330 = vmatpush2.bf16.xpose.msra.mxu0 0
      %331 = vmatprep.subr.bf16.mxu0 0
      %332 = vmatpush2.bf16.xpose.msra.mxu0 0
      %333 = vmatprep.subr.bf16.mxu0 0
      %334 = vmatpush2.bf16.xpose.msra.mxu0 0
      %335 = vmatprep.subr.bf16.mxu0 0
      %336 = vmatpush2.bf16.xpose.msra.mxu0 0
      %337 = vmatprep.subr.bf16.mxu0 0
      %338 = vmatpush2.bf16.xpose.msra.mxu0 0
      %339 = vmatprep.mubr.bf16.mxu0 0
      %340 = vmatmul.mubr.bf16.gmra.mxu0 %v302
      %v341 = vpop.f32.mrf.mxu0
      %v342 = vadd.f32 0.0, %v341
      %v343 = vpop.f32.mrf.mxu0
      %v344 = vpop.f32.mrf.mxu0
      %v345 = vpop.f32.mrf.mxu0
      %346 = vdwg.mxu0
      %v348 = vsel %vm300, %v289, 0
      %v351 = vsel %vm300, %v293, 0
      %353 = vmatprep.subr.bf16.mxu0 0
      %354 = vmatpush1.bf16.xpose.msra.mxu0 0
      %355 = vmatprep.subr.bf16.mxu0 0
      %356 = vmatpush1.bf16.xpose.msra.mxu0 0
      %357 = vmatprep.subr.bf16.mxu0 0
      %358 = vmatpush1.bf16.xpose.msra.mxu0 0
      %359 = vmatprep.subr.bf16.mxu0 0
      %360 = vmatpush1.bf16.xpose.msra.mxu0 0
      %361 = vmatprep.subr.bf16.mxu0 0
      %362 = vmatpush1.bf16.xpose.msra.mxu0 0
      %363 = vmatprep.subr.bf16.mxu0 0
      %364 = vmatpush1.bf16.xpose.msra.mxu0 0
      %365 = vmatprep.subr.bf16.mxu0 0
      %366 = vmatpush1.bf16.xpose.msra.mxu0 0
      %367 = vmatprep.subr.bf16.mxu0 0
      %368 = vmatpush1.bf16.xpose.msra.mxu0 %v351
      %369 = vmatprep.subr.bf16.mxu0 0
      %370 = vmatpush2.bf16.xpose.msra.mxu0 0
      %371 = vmatprep.subr.bf16.mxu0 0
      %372 = vmatpush2.bf16.xpose.msra.mxu0 0
      %373 = vmatprep.subr.bf16.mxu0 0
      %374 = vmatpush2.bf16.xpose.msra.mxu0 0
      %375 = vmatprep.subr.bf16.mxu0 0
      %376 = vmatpush2.bf16.xpose.msra.mxu0 0
      %377 = vmatprep.subr.bf16.mxu0 0
      %378 = vmatpush2.bf16.xpose.msra.mxu0 0
      %379 = vmatprep.subr.bf16.mxu0 0
      %380 = vmatpush2.bf16.xpose.msra.mxu0 0
      %381 = vmatprep.subr.bf16.mxu0 0
      %382 = vmatpush2.bf16.xpose.msra.mxu0 0
      %383 = vmatprep.subr.bf16.mxu0 0
      %384 = vmatpush2.bf16.xpose.msra.mxu0 0
      %385 = vmatprep.mubr.bf16.mxu0 0
      %386 = vmatmul.mubr.bf16.gmra.mxu0 %v348
      %v387 = vpop.f32.mrf.mxu0
      %v388 = vadd.f32 0.0, %v387
      %v389 = vpop.f32.mrf.mxu0
      %v390 = vpop.f32.mrf.mxu0
      %v391 = vpop.f32.mrf.mxu0
      %392 = vdwg.mxu0
      %v394 = vsel %vm300, %v290, 0
      %v397 = vsel %vm300, %v294, 0
      %399 = vmatprep.subr.bf16.mxu0 0
      %400 = vmatpush1.bf16.xpose.msra.mxu0 0
      %401 = vmatprep.subr.bf16.mxu0 0
      %402 = vmatpush1.bf16.xpose.msra.mxu0 0
      %403 = vmatprep.subr.bf16.mxu0 0
      %404 = vmatpush1.bf16.xpose.msra.mxu0 0
      %405 = vmatprep.subr.bf16.mxu0 0
      %406 = vmatpush1.bf16.xpose.msra.mxu0 0
      %407 = vmatprep.subr.bf16.mxu0 0
      %408 = vmatpush1.bf16.xpose.msra.mxu0 0
      %409 = vmatprep.subr.bf16.mxu0 0
      %410 = vmatpush1.bf16.xpose.msra.mxu0 0
      %411 = vmatprep.subr.bf16.mxu0 0
      %412 = vmatpush1.bf16.xpose.msra.mxu0 0
      %413 = vmatprep.subr.bf16.mxu0 0
      %414 = vmatpush1.bf16.xpose.msra.mxu0 %v397
      %415 = vmatprep.subr.bf16.mxu0 0
      %416 = vmatpush2.bf16.xpose.msra.mxu0 0
      %417 = vmatprep.subr.bf16.mxu0 0
      %418 = vmatpush2.bf16.xpose.msra.mxu0 0
      %419 = vmatprep.subr.bf16.mxu0 0
      %420 = vmatpush2.bf16.xpose.msra.mxu0 0
      %421 = vmatprep.subr.bf16.mxu0 0
      %422 = vmatpush2.bf16.xpose.msra.mxu0 0
      %423 = vmatprep.subr.bf16.mxu0 0
      %424 = vmatpush2.bf16.xpose.msra.mxu0 0
      %425 = vmatprep.subr.bf16.mxu0 0
      %426 = vmatpush2.bf16.xpose.msra.mxu0 0
      %427 = vmatprep.subr.bf16.mxu0 0
      %428 = vmatpush2.bf16.xpose.msra.mxu0 0
      %429 = vmatprep.subr.bf16.mxu0 0
      %430 = vmatpush2.bf16.xpose.msra.mxu0 0
      %431 = vmatprep.mubr.bf16.mxu0 0
      %432 = vmatmul.mubr.bf16.gmra.mxu0 %v394
      %v433 = vpop.f32.mrf.mxu0
      %v434 = vadd.f32 0.0, %v433
      %v435 = vpop.f32.mrf.mxu0
      %v436 = vpop.f32.mrf.mxu0
      %v437 = vpop.f32.mrf.mxu0
      %438 = vdwg.mxu0
      %v440 = vsel %vm300, %v291, 0
      %v443 = vsel %vm300, %v295, 0
      %445 = vmatprep.subr.bf16.mxu0 0
      %446 = vmatpush1.bf16.xpose.msra.mxu0 0
      %447 = vmatprep.subr.bf16.mxu0 0
      %448 = vmatpush1.bf16.xpose.msra.mxu0 0
      %449 = vmatprep.subr.bf16.mxu0 0
      %450 = vmatpush1.bf16.xpose.msra.mxu0 0
      %451 = vmatprep.subr.bf16.mxu0 0
      %452 = vmatpush1.bf16.xpose.msra.mxu0 0
      %453 = vmatprep.subr.bf16.mxu0 0
      %454 = vmatpush1.bf16.xpose.msra.mxu0 0
      %455 = vmatprep.subr.bf16.mxu0 0
      %456 = vmatpush1.bf16.xpose.msra.mxu0 0
      %457 = vmatprep.subr.bf16.mxu0 0
      %458 = vmatpush1.bf16.xpose.msra.mxu0 0
      %459 = vmatprep.subr.bf16.mxu0 0
      %460 = vmatpush1.bf16.xpose.msra.mxu0 %v443
      %461 = vmatprep.subr.bf16.mxu0 0
      %462 = vmatpush2.bf16.xpose.msra.mxu0 0
      %463 = vmatprep.subr.bf16.mxu0 0
      %464 = vmatpush2.bf16.xpose.msra.mxu0 0
      %465 = vmatprep.subr.bf16.mxu0 0
      %466 = vmatpush2.bf16.xpose.msra.mxu0 0
      %467 = vmatprep.subr.bf16.mxu0 0
      %468 = vmatpush2.bf16.xpose.msra.mxu0 0
      %469 = vmatprep.subr.bf16.mxu0 0
      %470 = vmatpush2.bf16.xpose.msra.mxu0 0
      %471 = vmatprep.subr.bf16.mxu0 0
      %472 = vmatpush2.bf16.xpose.msra.mxu0 0
      %473 = vmatprep.subr.bf16.mxu0 0
      %474 = vmatpush2.bf16.xpose.msra.mxu0 0
      %475 = vmatprep.subr.bf16.mxu0 0
      %476 = vmatpush2.bf16.xpose.msra.mxu0 0
      %477 = vmatprep.mubr.bf16.mxu0 0
      %478 = vmatmul.mubr.bf16.gmra.mxu0 %v440
      %v479 = vpop.f32.mrf.mxu0
      %v480 = vadd.f32 0.0, %v479
      %v481 = vpop.f32.mrf.mxu0
      %v482 = vpop.f32.mrf.mxu0
      %v483 = vpop.f32.mrf.mxu0
      %484 = vdwg.mxu0
      %v485 = vld [vmem:[#allocation2] sm:$0xff]
      %v486 = vld [vmem:[#allocation2 + $0x8] sm:$0xff]
      %v487 = vld [vmem:[#allocation2 + $0x10] sm:$0xff]
      %v488 = vld [vmem:[#allocation2 + $0x18] sm:$0xff]
      %v489 = vsel %vm300, %v342, -inf
      %490 = vmax.xlane.f32.xlu0 %v489
      %v491 = vpop.xlane.xlu0 %490
      %v492 = vsel %vm300, %v388, -inf
      %493 = vmax.xlane.f32.xlu0 %v492
      %v494 = vpop.xlane.xlu0 %493
      %v495 = vsel %vm300, %v434, -inf
      %496 = vmax.xlane.f32.xlu0 %v495
      %v497 = vpop.xlane.xlu0 %496
      %v498 = vsel %vm300, %v480, -inf
      %499 = vmax.xlane.f32.xlu0 %v498
      %v500 = vpop.xlane.xlu0 %499
      %v501 = vmax.f32 %v485, %v491
      %v502 = vmax.f32 %v486, %v494
      %v503 = vmax.f32 %v487, %v497
      %v504 = vmax.f32 %v488, %v500
      %v505 = vsub.f32 %v485, %v501
      %v506 = vsub.f32 %v486, %v502
      %v507 = vsub.f32 %v487, %v503
      %v508 = vsub.f32 %v488, %v504
      %v509 = vmul.f32 %v505, 1.442695
      %v510 = vpow.pop %v509
      %v511 = vmul.f32 %v506, 1.442695
      %v512 = vpow.pop %v511
      %v513 = vmul.f32 %v507, 1.442695
      %v514 = vpow.pop %v513
      %v515 = vmul.f32 %v508, 1.442695
      %v516 = vpow.pop %v515
      %518 = vset.pattern.permute.xlu0 0
      %519 = vperm.xlu0 %518, %v501
      %v520 = vpop.permute.xlu0 %519
      %523 = vset.pattern.permute.xlu0 0
      %524 = vperm.xlu0 %523, %v502
      %v525 = vpop.permute.xlu0 %524
      %528 = vset.pattern.permute.xlu0 0
      %529 = vperm.xlu0 %528, %v503
      %v530 = vpop.permute.xlu0 %529
      %533 = vset.pattern.permute.xlu0 0
      %534 = vperm.xlu0 %533, %v504
      %v535 = vpop.permute.xlu0 %534
      %v537 = vsub.f32 %v342, %v520
      %v538 = vsub.f32 %v388, %v525
      %v539 = vsub.f32 %v434, %v530
      %v540 = vsub.f32 %v480, %v535
      %v541 = vmul.f32 %v537, 1.442695
      %v542 = vpow.pop %v541
      %v543 = vmul.f32 %v538, 1.442695
      %v544 = vpow.pop %v543
      %v545 = vmul.f32 %v539, 1.442695
      %v546 = vpow.pop %v545
      %v547 = vmul.f32 %v540, 1.442695
      %v548 = vpow.pop %v547
      %v549 = vld [vmem:[#allocation3] sm:$0xff]
      %v550 = vld [vmem:[#allocation3 + $0x8] sm:$0xff]
      %v551 = vld [vmem:[#allocation3 + $0x10] sm:$0xff]
      %v552 = vld [vmem:[#allocation3 + $0x18] sm:$0xff]
      %v553 = vmul.f32 %v510, %v549
      %v554 = vmul.f32 %v512, %v550
      %v555 = vmul.f32 %v514, %v551
      %v556 = vmul.f32 %v516, %v552
      %v557 = vsel %vm300, %v542, 0.0
      %558 = vadd.xlane.f32.xlu0 %v557
      %v559 = vpop.xlane.xlu0 %558
      %v560 = vsel %vm300, %v544, 0.0
      %561 = vadd.xlane.f32.xlu0 %v560
      %v562 = vpop.xlane.xlu0 %561
      %v563 = vsel %vm300, %v546, 0.0
      %564 = vadd.xlane.f32.xlu0 %v563
      %v565 = vpop.xlane.xlu0 %564
      %v566 = vsel %vm300, %v548, 0.0
      %567 = vadd.xlane.f32.xlu0 %v566
      %v568 = vpop.xlane.xlu0 %567
      %v569 = vadd.f32 %v553, %v559
      %v570 = vadd.f32 %v554, %v562
      %v571 = vadd.f32 %v555, %v565
      %v572 = vadd.f32 %v556, %v568
      %vm573 = vcmask 7168
      %574 = vst.msk [vmem:[#allocation3] sm:$0xff] %vm573, %v569
      %575 = vst.msk [vmem:[#allocation3 + $0x8] sm:$0xff] %vm573, %v570
      %576 = vst.msk [vmem:[#allocation3 + $0x10] sm:$0xff] %vm573, %v571
      %577 = vst.msk [vmem:[#allocation3 + $0x18] sm:$0xff] %vm573, %v572
      %v578 = vld [vmem:[#allocation4] sm:$0xff]
      %v579 = vld [vmem:[#allocation4 + $0x8] sm:$0xff]
      %v580 = vld [vmem:[#allocation4 + $0x10] sm:$0xff]
      %v581 = vld [vmem:[#allocation4 + $0x18] sm:$0xff]
      %583 = vset.pattern.permute.xlu0 0
      %584 = vperm.xlu0 %583, %v510
      %v585 = vpop.permute.xlu0 %584
      %588 = vset.pattern.permute.xlu0 0
      %589 = vperm.xlu0 %588, %v512
      %v590 = vpop.permute.xlu0 %589
      %593 = vset.pattern.permute.xlu0 0
      %594 = vperm.xlu0 %593, %v514
      %v595 = vpop.permute.xlu0 %594
      %598 = vset.pattern.permute.xlu0 0
      %599 = vperm.xlu0 %598, %v516
      %v600 = vpop.permute.xlu0 %599
      %v602 = vmul.f32 %v585, %v578
      %v603 = vmul.f32 %v590, %v579
      %v604 = vmul.f32 %v595, %v580
      %v605 = vmul.f32 %v600, %v581
      %v606 = vpack.c.bf16 %v542, %v542
      %v607 = vpack.c.bf16 %v544, %v544
      %v608 = vpack.c.bf16 %v546, %v546
      %v609 = vpack.c.bf16 %v548, %v548
      %v611 = vsel %vm300, %v606, 0
      %vm613 = vcmask 1043456
      %v615 = vsel %vm613, %v296, 0
      %617 = vmatprep.subr.bf16.mxu0 0
      %618 = vmatpush1.bf16.msra.mxu0 0
      %619 = vmatprep.subr.bf16.mxu0 0
      %620 = vmatpush1.bf16.msra.mxu0 0
      %621 = vmatprep.subr.bf16.mxu0 0
      %622 = vmatpush1.bf16.msra.mxu0 0
      %623 = vmatprep.subr.bf16.mxu0 0
      %624 = vmatpush1.bf16.msra.mxu0 0
      %625 = vmatprep.subr.bf16.mxu0 0
      %626 = vmatpush1.bf16.msra.mxu0 0
      %627 = vmatprep.subr.bf16.mxu0 0
      %628 = vmatpush1.bf16.msra.mxu0 0
      %629 = vmatprep.subr.bf16.mxu0 0
      %630 = vmatpush1.bf16.msra.mxu0 0
      %631 = vmatprep.subr.bf16.mxu0 0
      %632 = vmatpush1.bf16.msra.mxu0 %v615
      %633 = vmatprep.subr.bf16.mxu0 0
      %634 = vmatpush2.bf16.msra.mxu0 0
      %635 = vmatprep.subr.bf16.mxu0 0
      %636 = vmatpush2.bf16.msra.mxu0 0
      %637 = vmatprep.subr.bf16.mxu0 0
      %638 = vmatpush2.bf16.msra.mxu0 0
      %639 = vmatprep.subr.bf16.mxu0 0
      %640 = vmatpush2.bf16.msra.mxu0 0
      %641 = vmatprep.subr.bf16.mxu0 0
      %642 = vmatpush2.bf16.msra.mxu0 0
      %643 = vmatprep.subr.bf16.mxu0 0
      %644 = vmatpush2.bf16.msra.mxu0 0
      %645 = vmatprep.subr.bf16.mxu0 0
      %646 = vmatpush2.bf16.msra.mxu0 0
      %647 = vmatprep.subr.bf16.mxu0 0
      %648 = vmatpush2.bf16.msra.mxu0 0
      %649 = vmatprep.mubr.bf16.mxu0 0
      %650 = vmatmul.mubr.bf16.gmra.mxu0 %v611
      %v651 = vpop.f32.mrf.mxu0
      %v652 = vadd.f32 0.0, %v651
      %v653 = vpop.f32.mrf.mxu0
      %v654 = vpop.f32.mrf.mxu0
      %v655 = vpop.f32.mrf.mxu0
      %656 = vdwg.mxu0
      %v658 = vsel %vm300, %v607, 0
      %v661 = vsel %vm613, %v297, 0
      %663 = vmatprep.subr.bf16.mxu0 0
      %664 = vmatpush1.bf16.msra.mxu0 0
      %665 = vmatprep.subr.bf16.mxu0 0
      %666 = vmatpush1.bf16.msra.mxu0 0
      %667 = vmatprep.subr.bf16.mxu0 0
      %668 = vmatpush1.bf16.msra.mxu0 0
      %669 = vmatprep.subr.bf16.mxu0 0
      %670 = vmatpush1.bf16.msra.mxu0 0
      %671 = vmatprep.subr.bf16.mxu0 0
      %672 = vmatpush1.bf16.msra.mxu0 0
      %673 = vmatprep.subr.bf16.mxu0 0
      %674 = vmatpush1.bf16.msra.mxu0 0
      %675 = vmatprep.subr.bf16.mxu0 0
      %676 = vmatpush1.bf16.msra.mxu0 0
      %677 = vmatprep.subr.bf16.mxu0 0
      %678 = vmatpush1.bf16.msra.mxu0 %v661
      %679 = vmatprep.subr.bf16.mxu0 0
      %680 = vmatpush2.bf16.msra.mxu0 0
      %681 = vmatprep.subr.bf16.mxu0 0
      %682 = vmatpush2.bf16.msra.mxu0 0
      %683 = vmatprep.subr.bf16.mxu0 0
      %684 = vmatpush2.bf16.msra.mxu0 0
      %685 = vmatprep.subr.bf16.mxu0 0
      %686 = vmatpush2.bf16.msra.mxu0 0
      %687 = vmatprep.subr.bf16.mxu0 0
      %688 = vmatpush2.bf16.msra.mxu0 0
      %689 = vmatprep.subr.bf16.mxu0 0
      %690 = vmatpush2.bf16.msra.mxu0 0
      %691 = vmatprep.subr.bf16.mxu0 0
      %692 = vmatpush2.bf16.msra.mxu0 0
      %693 = vmatprep.subr.bf16.mxu0 0
      %694 = vmatpush2.bf16.msra.mxu0 0
      %695 = vmatprep.mubr.bf16.mxu0 0
      %696 = vmatmul.mubr.bf16.gmra.mxu0 %v658
      %v697 = vpop.f32.mrf.mxu0
      %v698 = vadd.f32 0.0, %v697
      %v699 = vpop.f32.mrf.mxu0
      %v700 = vpop.f32.mrf.mxu0
      %v701 = vpop.f32.mrf.mxu0
      %702 = vdwg.mxu0
      %v704 = vsel %vm300, %v608, 0
      %v707 = vsel %vm613, %v298, 0
      %709 = vmatprep.subr.bf16.mxu0 0
      %710 = vmatpush1.bf16.msra.mxu0 0
      %711 = vmatprep.subr.bf16.mxu0 0
      %712 = vmatpush1.bf16.msra.mxu0 0
      %713 = vmatprep.subr.bf16.mxu0 0
      %714 = vmatpush1.bf16.msra.mxu0 0
      %715 = vmatprep.subr.bf16.mxu0 0
      %716 = vmatpush1.bf16.msra.mxu0 0
      %717 = vmatprep.subr.bf16.mxu0 0
      %718 = vmatpush1.bf16.msra.mxu0 0
      %719 = vmatprep.subr.bf16.mxu0 0
      %720 = vmatpush1.bf16.msra.mxu0 0
      %721 = vmatprep.subr.bf16.mxu0 0
      %722 = vmatpush1.bf16.msra.mxu0 0
      %723 = vmatprep.subr.bf16.mxu0 0
      %724 = vmatpush1.bf16.msra.mxu0 %v707
      %725 = vmatprep.subr.bf16.mxu0 0
      %726 = vmatpush2.bf16.msra.mxu0 0
      %727 = vmatprep.subr.bf16.mxu0 0
      %728 = vmatpush2.bf16.msra.mxu0 0
      %729 = vmatprep.subr.bf16.mxu0 0
      %730 = vmatpush2.bf16.msra.mxu0 0
      %731 = vmatprep.subr.bf16.mxu0 0
      %732 = vmatpush2.bf16.msra.mxu0 0
      %733 = vmatprep.subr.bf16.mxu0 0
      %734 = vmatpush2.bf16.msra.mxu0 0
      %735 = vmatprep.subr.bf16.mxu0 0
      %736 = vmatpush2.bf16.msra.mxu0 0
      %737 = vmatprep.subr.bf16.mxu0 0
      %738 = vmatpush2.bf16.msra.mxu0 0
      %739 = vmatprep.subr.bf16.mxu0 0
      %740 = vmatpush2.bf16.msra.mxu0 0
      %741 = vmatprep.mubr.bf16.mxu0 0
      %742 = vmatmul.mubr.bf16.gmra.mxu0 %v704
      %v743 = vpop.f32.mrf.mxu0
      %v744 = vadd.f32 0.0, %v743
      %v745 = vpop.f32.mrf.mxu0
      %v746 = vpop.f32.mrf.mxu0
      %v747 = vpop.f32.mrf.mxu0
      %748 = vdwg.mxu0
      %v750 = vsel %vm300, %v609, 0
      %v753 = vsel %vm613, %v299, 0
      %755 = vmatprep.subr.bf16.mxu0 0
      %756 = vmatpush1.bf16.msra.mxu0 0
      %757 = vmatprep.subr.bf16.mxu0 0
      %758 = vmatpush1.bf16.msra.mxu0 0
      %759 = vmatprep.subr.bf16.mxu0 0
      %760 = vmatpush1.bf16.msra.mxu0 0
      %761 = vmatprep.subr.bf16.mxu0 0
      %762 = vmatpush1.bf16.msra.mxu0 0
      %763 = vmatprep.subr.bf16.mxu0 0
      %764 = vmatpush1.bf16.msra.mxu0 0
      %765 = vmatprep.subr.bf16.mxu0 0
      %766 = vmatpush1.bf16.msra.mxu0 0
      %767 = vmatprep.subr.bf16.mxu0 0
      %768 = vmatpush1.bf16.msra.mxu0 0
      %769 = vmatprep.subr.bf16.mxu0 0
      %770 = vmatpush1.bf16.msra.mxu0 %v753
      %771 = vmatprep.subr.bf16.mxu0 0
      %772 = vmatpush2.bf16.msra.mxu0 0
      %773 = vmatprep.subr.bf16.mxu0 0
      %774 = vmatpush2.bf16.msra.mxu0 0
      %775 = vmatprep.subr.bf16.mxu0 0
      %776 = vmatpush2.bf16.msra.mxu0 0
      %777 = vmatprep.subr.bf16.mxu0 0
      %778 = vmatpush2.bf16.msra.mxu0 0
      %779 = vmatprep.subr.bf16.mxu0 0
      %780 = vmatpush2.bf16.msra.mxu0 0
      %781 = vmatprep.subr.bf16.mxu0 0
      %782 = vmatpush2.bf16.msra.mxu0 0
      %783 = vmatprep.subr.bf16.mxu0 0
      %784 = vmatpush2.bf16.msra.mxu0 0
      %785 = vmatprep.subr.bf16.mxu0 0
      %786 = vmatpush2.bf16.msra.mxu0 0
      %787 = vmatprep.mubr.bf16.mxu0 0
      %788 = vmatmul.mubr.bf16.gmra.mxu0 %v750
      %v789 = vpop.f32.mrf.mxu0
      %v790 = vadd.f32 0.0, %v789
      %v791 = vpop.f32.mrf.mxu0
      %v792 = vpop.f32.mrf.mxu0
      %v793 = vpop.f32.mrf.mxu0
      %794 = vdwg.mxu0
      %v795 = vadd.f32 %v602, %v652
      %v796 = vadd.f32 %v603, %v698
      %v797 = vadd.f32 %v604, %v744
      %v798 = vadd.f32 %v605, %v790
      %799 = vst.msk [vmem:[#allocation4] sm:$0xff] %vm300, %v795
      %800 = vst.msk [vmem:[#allocation4 + $0x8] sm:$0xff] %vm300, %v796
      %801 = vst.msk [vmem:[#allocation4 + $0x10] sm:$0xff] %vm300, %v797
      %802 = vst.msk [vmem:[#allocation4 + $0x18] sm:$0xff] %vm300, %v798
      %803 = vst.msk [vmem:[#allocation2] sm:$0xff] %vm573, %v501
      %804 = vst.msk [vmem:[#allocation2 + $0x8] sm:$0xff] %vm573, %v502
      %805 = vst.msk [vmem:[#allocation2 + $0x10] sm:$0xff] %vm573, %v503
      %806 = vst.msk [vmem:[#allocation2 + $0x18] sm:$0xff] %vm573, %v504
      // Predicated region
      $region37: #{cross_attention.8} parent=31 // pred_check
        %p807 = pneg %p270
      $region38: #{cross_attention.8} parent=31 // pred_check_branch
        %809 = sbr.rel (%p807) target = $region40
      $region39: #{cross_attention.8} parent=31 // pred_region
        %v810 = vld [vmem:[#allocation3] sm:$0xff]
        %v811 = vld [vmem:[#allocation3 + $0x8] sm:$0xff]
        %v812 = vld [vmem:[#allocation3 + $0x10] sm:$0xff]
        %v813 = vld [vmem:[#allocation3 + $0x18] sm:$0xff]
        %v814 = vrcp.pop %v810
        %v815 = vrcp.pop %v811
        %v816 = vrcp.pop %v812
        %v817 = vrcp.pop %v813
        %v818 = vld [vmem:[#allocation4] sm:$0xff]
        %820 = vset.pattern.permute.xlu0 0
        %821 = vperm.xlu0 %820, %v814
        %v822 = vpop.permute.xlu0 %821
        %v824 = vmul.f32 %v818, %v822
        %v825 = vpack.c.bf16 %v824, %v824
        %vm826 = vcmask 60416
        %827 = vst.msk [vmem:[%s268] sm:$0xf] %vm826, %v825
        %s828 = scalar_lea.vmem [#allocation4], 8
        %v829 = vld [vmem:[%s828] sm:$0xff]
        %831 = vset.pattern.permute.xlu0 0
        %832 = vperm.xlu0 %831, %v815
        %v833 = vpop.permute.xlu0 %832
        %v835 = vmul.f32 %v829, %v833
        %v836 = vpack.c.bf16 %v835, %v835
        %v838 = vunpack.c.l.b16 %v836
        %v839 = vpack.c.b16 %v838, %v838
        %840 = vrot.lane.b32.xlu0 %v839, 8
        %v841 = vpop.permute.xlu0 %840
        %vm843 = vcmask 126016
        %844 = vst.msk [vmem:[%s268] sm:$0xf] %vm843, %v841
        %s845 = scalar_lea.vmem [#allocation4], 16
        %v846 = vld [vmem:[%s845] sm:$0xff]
        %848 = vset.pattern.permute.xlu0 0
        %849 = vperm.xlu0 %848, %v816
        %v850 = vpop.permute.xlu0 %849
        %v852 = vmul.f32 %v846, %v850
        %v853 = vpack.c.bf16 %v852, %v852
        %v855 = vunpack.c.l.b16 %v853
        %v856 = vpack.c.b16 %v855, %v855
        %857 = vrot.lane.b32.xlu0 %v856, 16
        %v858 = vpop.permute.xlu0 %857
        %vm860 = vcmask 191616
        %861 = vst.msk [vmem:[%s268] sm:$0xf] %vm860, %v858
        %s862 = scalar_lea.vmem [#allocation4], 24
        %v863 = vld [vmem:[%s862] sm:$0xff]
        %865 = vset.pattern.permute.xlu0 0
        %866 = vperm.xlu0 %865, %v817
        %v867 = vpop.permute.xlu0 %866
        %v869 = vmul.f32 %v863, %v867
        %v870 = vpack.c.bf16 %v869, %v869
        %v872 = vunpack.c.l.b16 %v870
        %v873 = vpack.c.b16 %v872, %v872
        %874 = vrot.lane.b32.xlu0 %v873, 24
        %v875 = vpop.permute.xlu0 %874
        %vm877 = vcmask 257216
        %878 = vst.msk [vmem:[%s268] sm:$0xf] %vm877, %v875
      $region40: #{cross_attention.8} parent=31 // pred_fallthru
        _
      %p879 = scmp.lt.s32.totalorder %s19, 1
      %s880 = scalar_select %p879, %s19, 1
      %p881 = scmp.lt.s32.totalorder %s20, 0
      %s882 = scalar_select %p881, %s20, 0
      %s883 = sadd.s32 %s882, %s880
      %s884 = smul.addr %s883, 4
      %s885 = scalar_lea.vmem %s3, %s884
      // Predicated region
      $region41: #{cross_attention.8} parent=31 // pred_check
        %p886 = pneg %p137
      $region42: #{cross_attention.8} parent=31 // pred_check_branch
        %888 = sbr.rel (%p886) target = $region44
      $region43: #{cross_attention.8} parent=31 // pred_region
        _
      $region44: #{cross_attention.8} parent=31 // pred_fallthru
        _
    $region32: #{cross_attention.8} parent=5 // pred_fallthru
      _
    %p889 = scmp.le.s32.totalorder 2, %s9
    // Predicated region
    $region45: #{cross_attention.8} parent=5 // pred_check
      %p890 = pneg %p889
    $region46: #{cross_attention.8} parent=5 // pred_check_branch
      %892 = sbr.rel (%p890) target = $region48
    $region47: #{cross_attention.8} parent=5 // pred_region
      %s893 = ssub.s32 %s9, 2
      // Predicated region
      $region49: #{cross_attention.8} parent=47 // pred_check
        %p894 = pneg %p143
      $region50: #{cross_attention.8} parent=47 // pred_check_branch
        %896 = sbr.rel (%p894) target = $region52
      $region51: #{cross_attention.8} parent=47 // pred_region
        %p897 = scmp.lt.s32.totalorder %s22, 1
        %s898 = scalar_select %p897, %s22, 1
        %p899 = scmp.lt.s32.totalorder %s23, 0
        %s900 = scalar_select %p899, %s23, 0
        %s901 = sadd.s32 %s900, %s898
        %s902 = smul.addr %s901, 4
        %s903 = scalar_lea.vmem %s3, %s902
      $region52: #{cross_attention.8} parent=47 // pred_fallthru
        _
    $region48: #{cross_attention.8} parent=5 // pred_fallthru
      _
  $region6: #{cross_attention.8} parent=0 // loop_footer
    %s13 = sadd.s32 1, %s9
  $region7: #{cross_attention.8} parent=0 // loop_footer_branch
    %8 = sbr.rel target = $region3
  $region8: #{cross_attention.8} parent=0 // loop_exit
    _

</llo_original>
